<compile_context>
chip_gen: v6e
topology: v6e:2x2x1
jax: 0.10.0
libtpu: 0.0.40
codegen_flags: <defaults>
</compile_context>

<pallas_src>
import functools
import math

import jax
import jax.numpy as jnp
from jax.experimental import pallas as pl
from jax.experimental.pallas import tpu as pltpu


# ----------------------------------------------------------------------------
# helpers (traced inside the kernel)
# ----------------------------------------------------------------------------
def _layernorm(x, g, b, eps=1e-8):
    mu = jnp.mean(x, axis=-1, keepdims=True)
    var = jnp.mean((x - mu) ** 2, axis=-1, keepdims=True)
    return (x - mu) * jax.lax.rsqrt(var + eps) * g + b


# ----------------------------------------------------------------------------
# fused kernel: embedding combine + L transformer blocks + final layernorm
# grid = (B // TB, L); activations live in out_ref (resident across the L axis)
# ----------------------------------------------------------------------------
def _bert4rec_stack_kernel(
    item_ref, pose_ref, mask_ref,
    ln1_g_ref, ln1_b_ref,
    wq_ref, wk_ref, wv_ref, bq_ref, bk_ref, bv_ref,
    wo_ref, bo_ref,
    ln2_g_ref, ln2_b_ref,
    w1_ref, b1_ref, w2_ref, b2_ref,
    lnf_g_ref, lnf_b_ref,
    out_ref,
    *, num_heads, emb_scale):
    l = pl.program_id(1)
    TB, S, H = out_ref.shape
    R = TB * S
    hd = H // num_heads
    attn_scale = 1.0 / math.sqrt(hd)

    mask = mask_ref[...]                                   # (TB, S, 1) f32

    # -- fold the embedding combine into the first layer iteration -----------
    @pl.when(l == 0)
    def _():
        out_ref[...] = (item_ref[...] * emb_scale + pose_ref[...]) * mask

    x = out_ref[...].reshape(R, H)                         # resident activations

    # ---------------- attention sub-layer -----------------------------------
    q_in = _layernorm(x, ln1_g_ref[0], ln1_b_ref[0])

    q = jnp.dot(q_in.astype(jnp.bfloat16), wq_ref[0],
                preferred_element_type=jnp.float32) + bq_ref[0]
    k = jnp.dot(x.astype(jnp.bfloat16), wk_ref[0],
                preferred_element_type=jnp.float32) + bk_ref[0]
    v = jnp.dot(x.astype(jnp.bfloat16), wv_ref[0],
                preferred_element_type=jnp.float32) + bv_ref[0]

    # split heads once: (R, H) -> (nh*TB, S, hd), heads stacked on the batch dim
    def split_heads(t):
        t3 = t.reshape(TB, S, H)
        return jnp.concatenate(
            [t3[:, :, h * hd:(h + 1) * hd] for h in range(num_heads)], axis=0)

    qh = split_heads(q).astype(jnp.bfloat16)
    kh = split_heads(k).astype(jnp.bfloat16)
    vh = split_heads(v).astype(jnp.bfloat16)

    # batched scaled dot-product attention over all (batch, head) pairs
    scores = jnp.einsum('bqd,bkd->bqk', qh, kh,
                        preferred_element_type=jnp.float32) * attn_scale
    scores = scores - jnp.max(scores, axis=-1, keepdims=True)
    p = jnp.exp(scores)
    p = p * pl.reciprocal(jnp.sum(p, axis=-1, keepdims=True), approx=True)
    attn = jnp.einsum('bqk,bkd->bqd', p.astype(jnp.bfloat16), vh,
                      preferred_element_type=jnp.float32)   # (nh*TB, S, hd)

    # merge heads back: concat head chunks along the lane (hidden) dim
    attn = jnp.concatenate(
        [attn[h * TB:(h + 1) * TB] for h in range(num_heads)], axis=-1)
    attn = attn.reshape(R, H)

    mha = jnp.dot(attn.astype(jnp.bfloat16), wo_ref[0],
                  preferred_element_type=jnp.float32) + bo_ref[0]
    x2 = q_in + mha                                        # residual: Q + mha

    # ---------------- point-wise feed-forward sub-layer ----------------------
    y = _layernorm(x2, ln2_g_ref[0], ln2_b_ref[0])
    f = jnp.dot(y.astype(jnp.bfloat16), w1_ref[0],
                preferred_element_type=jnp.float32) + b1_ref[0]
    f = jnp.maximum(f, 0.0)
    f = jnp.dot(f.astype(jnp.bfloat16), w2_ref[0],
                preferred_element_type=jnp.float32) + b2_ref[0]
    y = y + f

    y_masked = y.reshape(TB, S, H) * mask
    out_ref[...] = y_masked

    # -- fold the final layernorm into the last layer iteration --------------
    @pl.when(l == pl.num_programs(1) - 1)
    def _():
        feats = _layernorm(y_masked.reshape(R, H), lnf_g_ref[...], lnf_b_ref[...])
        out_ref[...] = feats.reshape(TB, S, H)


def bert4rec_log2feats(params, item_e, pos_e, mask3, *, num_heads, block_b=8):
    B, S, H = item_e.shape
    L = params["wq"].shape[0]
    assert H % num_heads == 0
    tb = math.gcd(B, block_b)                              # batch tile

    to_bf16 = lambda w: w.astype(jnp.bfloat16)             # MXU-native weights

    spec_act = pl.BlockSpec((tb, S, H), lambda b, l: (b, 0, 0))
    spec_msk = pl.BlockSpec((tb, S, 1), lambda b, l: (b, 0, 0))
    spec_w   = pl.BlockSpec((1, H, H), lambda b, l: (l, 0, 0))
    spec_v   = pl.BlockSpec((1, 1, H), lambda b, l: (l, 0, 0))
    spec_fln = pl.BlockSpec((1, H),    lambda b, l: (0, 0))

    return pl.pallas_call(
        functools.partial(_bert4rec_stack_kernel,
                          num_heads=num_heads, emb_scale=math.sqrt(H)),
        out_shape=jax.ShapeDtypeStruct((B, S, H), jnp.float32),
        grid=(B // tb, L),
        in_specs=[spec_act, spec_act, spec_msk,
                  spec_v, spec_v,
                  spec_w, spec_w, spec_w, spec_v, spec_v, spec_v,
                  spec_w, spec_v,
                  spec_v, spec_v,
                  spec_w, spec_v, spec_w, spec_v,
                  spec_fln, spec_fln],
        out_specs=spec_act,
        compiler_params=pltpu.CompilerParams(
            dimension_semantics=("parallel", "arbitrary"),
            # raise v5e's 16 MiB scoped default; tune up further for large TB/H
            vmem_limit_bytes=32 * 1024 * 1024),
    )(item_e, pos_e, mask3,
      params["ln1_g"], params["ln1_b"],
      to_bf16(params["wq"]), to_bf16(params["wk"]), to_bf16(params["wv"]),
      params["bq"], params["bk"], params["bv"],
      to_bf16(params["wo"]), params["bo"],
      params["ln2_g"], params["ln2_b"],
      to_bf16(params["w1"]), params["b1"],
      to_bf16(params["w2"]), params["b2"],
      params["ln_f_g"], params["ln_f_b"])


# ----------------------------------------------------------------------------
# full Bert4Rec forward (training loss)
# ----------------------------------------------------------------------------
def bert4rec_forward(params, log_seqs, pos_seqs, neg_seqs, positions, *,
                     num_heads, block_b=8):
    # embedding gathers are glue (plain JAX)
    item_e = jnp.take(params["item_emb"], log_seqs, axis=0)      # (B,S,H)
    pos_e = jnp.take(params["pos_emb"], positions, axis=0)       # (B,S,H)
    mask3 = (log_seqs != 0).astype(jnp.float32)[..., None]       # (B,S,1)

    log_feats = bert4rec_log2feats(params, item_e, pos_e, mask3,
                                   num_heads=num_heads, block_b=block_b)

    pos_embs = jnp.take(params["item_emb"], pos_seqs, axis=0)
    neg_embs = jnp.take(params["item_emb"], neg_seqs, axis=0)

    # final dot-over-H + masked-mean BCEWithLogitsLoss: cheap lane-dense glue
    pos_logits = jnp.sum(log_feats * pos_embs, axis=-1)          # (B,S)
    neg_logits = jnp.sum(log_feats * neg_embs, axis=-1)          # (B,S)

    m = (pos_seqs > 0).astype(jnp.float32)
    n = jnp.sum(m)
    pos_loss = jnp.sum(jax.nn.softplus(-pos_logits) * m) / n     # labels = 1
    neg_loss = jnp.sum(jax.nn.softplus(neg_logits) * m) / n      # labels = 0
    return pos_loss + neg_loss


# ----------------------------------------------------------------------------
# pure-JAX reference (for a loose sanity check)
# ----------------------------------------------------------------------------
def bert4rec_forward_ref(params, log_seqs, pos_seqs, neg_seqs, positions, *, num_heads):
    H = params["item_emb"].shape[1]
    L = params["wq"].shape[0]
    hd = H // num_heads

    def ln(x, g, b):
        mu = x.mean(-1, keepdims=True)
        var = ((x - mu) ** 2).mean(-1, keepdims=True)
        return (x - mu) * jax.lax.rsqrt(var + 1e-8) * g + b

    seqs = jnp.take(params["item_emb"], log_seqs, axis=0) * math.sqrt(H)
    seqs = seqs + jnp.take(params["pos_emb"], positions, axis=0)
    mask = (log_seqs != 0).astype(jnp.float32)[..., None]
    seqs = seqs * mask
    B, S, _ = seqs.shape

    for i in range(L):
        q_in = ln(seqs, params["ln1_g"][i], params["ln1_b"][i])
        q = q_in @ params["wq"][i] + params["bq"][i]
        k = seqs @ params["wk"][i] + params["bk"][i]
        v = seqs @ params["wv"][i] + params["bv"][i]
        sp = lambda t: t.reshape(B, S, num_heads, hd).transpose(0, 2, 1, 3)
        sc = jnp.einsum('bhqd,bhkd->bhqk', sp(q), sp(k)) / math.sqrt(hd)
        p = jax.nn.softmax(sc, axis=-1)
        at = jnp.einsum('bhqk,bhkd->bhqd', p, sp(v)).transpose(0, 2, 1, 3)
        mha = at.reshape(B, S, H) @ params["wo"][i] + params["bo"][i]
        seqs = q_in + mha
        y = ln(seqs, params["ln2_g"][i], params["ln2_b"][i])
        f = jax.nn.relu(y @ params["w1"][i] + params["b1"][i])
        f = f @ params["w2"][i] + params["b2"][i]
        seqs = (y + f) * mask

    feats = ln(seqs, params["ln_f_g"], params["ln_f_b"])
    pos_embs = jnp.take(params["item_emb"], pos_seqs, axis=0)
    neg_embs = jnp.take(params["item_emb"], neg_seqs, axis=0)
    pos_l = jnp.sum(feats * pos_embs, -1)
    neg_l = jnp.sum(feats * neg_embs, -1)
    m = (pos_seqs > 0).astype(jnp.float32)
    n = jnp.sum(m)
    return (jnp.sum(jax.nn.softplus(-pos_l) * m) / n
            + jnp.sum(jax.nn.softplus(neg_l) * m) / n)


# ----------------------------------------------------------------------------
# deterministic synthetic parameters (stacked per-layer along leading L axis)
# ----------------------------------------------------------------------------
def init_params(key, item_num, max_len, H, trm_num):
    keys = jax.random.split(key, 8)
    item_emb = 0.02 * jax.random.normal(keys[0], (item_num + 2, H), jnp.float32)
    item_emb = item_emb.at[0].set(0.0)                      # padding_idx = 0
    pos_emb = 0.02 * jax.random.normal(keys[1], (max_len + 100, H), jnp.float32)

    def nrm(k, shape, s=0.05):
        return s * jax.random.normal(k, shape, jnp.float32)

    L = trm_num
    ones_v = jnp.ones((L, 1, H), jnp.float32)
    zeros_v = jnp.zeros((L, 1, H), jnp.float32)
    return dict(
        item_emb=item_emb, pos_emb=pos_emb,
        ln1_g=ones_v, ln1_b=zeros_v,
        wq=nrm(keys[2], (L, H, H)), wk=nrm(keys[3], (L, H, H)),
        wv=nrm(keys[4], (L, H, H)),
        bq=zeros_v, bk=zeros_v, bv=zeros_v,
        wo=nrm(keys[5], (L, H, H)), bo=zeros_v,
        ln2_g=ones_v, ln2_b=zeros_v,
        w1=nrm(keys[6], (L, H, H)), b1=0.01 * ones_v,
        w2=nrm(keys[7], (L, H, H)), b2=0.01 * ones_v,
        ln_f_g=jnp.ones((1, H), jnp.float32),
        ln_f_b=jnp.zeros((1, H), jnp.float32),
    )
    # TODO(synk): self.projector (nn.Linear) is unused in forward(); omitted.


# ----------------------------------------------------------------------------
if __name__ == "__main__":
    key = jax.random.PRNGKey(0)
    B, S, H = 2, 8, 32
    num_heads, trm_num = 2, 2
    item_num = 20

    params = init_params(key, item_num=item_num, max_len=S, H=H, trm_num=trm_num)

    log_seqs = jnp.array([[0, 0, 3, 5, 7, 2, 9, 4],
                          [0, 1, 6, 8, 2, 3, 5, 7]], dtype=jnp.int32)
    pos_seqs = jnp.where(log_seqs > 0, (log_seqs % item_num) + 1, 0).astype(jnp.int32)
    neg_seqs = jnp.where(log_seqs > 0, ((log_seqs + 5) % item_num) + 1, 0).astype(jnp.int32)
    positions = jnp.broadcast_to(jnp.arange(S, dtype=jnp.int32), (B, S))

    fwd = jax.jit(functools.partial(bert4rec_forward, num_heads=num_heads))
    loss = jax.block_until_ready(fwd(params, log_seqs, pos_seqs, neg_seqs, positions))

    ref = bert4rec_forward_ref(params, log_seqs, pos_seqs, neg_seqs, positions,
                               num_heads=num_heads)
    assert jnp.isfinite(loss), loss
    assert abs(float(loss) - float(ref)) < 5e-2, (loss, ref)
    print("KERNEL_OK")
</pallas_src>

<mosaic_0001>
module attributes {stable_mosaic.version = 11 : i64} {
  func.func @_bert4rec_stack_kernel(%arg0: i32, %arg1: i32, %arg2: memref<2x8x32xf32, #tpu.memory_space<vmem>>, %arg3: memref<2x8x32xf32, #tpu.memory_space<vmem>>, %arg4: memref<2x8x1xf32, #tpu.memory_space<vmem>>, %arg5: memref<1x1x32xf32, #tpu.memory_space<vmem>>, %arg6: memref<1x1x32xf32, #tpu.memory_space<vmem>>, %arg7: memref<1x32x32xbf16, #tpu.memory_space<vmem>>, %arg8: memref<1x32x32xbf16, #tpu.memory_space<vmem>>, %arg9: memref<1x32x32xbf16, #tpu.memory_space<vmem>>, %arg10: memref<1x1x32xf32, #tpu.memory_space<vmem>>, %arg11: memref<1x1x32xf32, #tpu.memory_space<vmem>>, %arg12: memref<1x1x32xf32, #tpu.memory_space<vmem>>, %arg13: memref<1x32x32xbf16, #tpu.memory_space<vmem>>, %arg14: memref<1x1x32xf32, #tpu.memory_space<vmem>>, %arg15: memref<1x1x32xf32, #tpu.memory_space<vmem>>, %arg16: memref<1x1x32xf32, #tpu.memory_space<vmem>>, %arg17: memref<1x32x32xbf16, #tpu.memory_space<vmem>>, %arg18: memref<1x1x32xf32, #tpu.memory_space<vmem>>, %arg19: memref<1x32x32xbf16, #tpu.memory_space<vmem>>, %arg20: memref<1x1x32xf32, #tpu.memory_space<vmem>>, %arg21: memref<1x32xf32, #tpu.memory_space<vmem>>, %arg22: memref<1x32xf32, #tpu.memory_space<vmem>>, %arg23: memref<2x8x32xf32, #tpu.memory_space<vmem>>) attributes {dimension_semantics = [#tpu.dimension_semantics<parallel>, #tpu.dimension_semantics<arbitrary>], iteration_bounds = array<i64: 1, 2>, scalar_prefetch = 0 : i64, scratch_operands = 0 : i64, tpu.core_type = #tpu.core_type<tc>, window_params = [{transform_indices = @transform_0, window_bounds = array<i64: 2, 8, 32>}, {transform_indices = @transform_1, window_bounds = array<i64: 2, 8, 32>}, {transform_indices = @transform_2, window_bounds = array<i64: 2, 8, 1>}, {transform_indices = @transform_3, window_bounds = array<i64: 1, 1, 32>}, {transform_indices = @transform_4, window_bounds = array<i64: 1, 1, 32>}, {transform_indices = @transform_5, window_bounds = array<i64: 1, 32, 32>}, {transform_indices = @transform_6, window_bounds = array<i64: 1, 32, 32>}, {transform_indices = @transform_7, window_bounds = array<i64: 1, 32, 32>}, {transform_indices = @transform_8, window_bounds = array<i64: 1, 1, 32>}, {transform_indices = @transform_9, window_bounds = array<i64: 1, 1, 32>}, {transform_indices = @transform_10, window_bounds = array<i64: 1, 1, 32>}, {transform_indices = @transform_11, window_bounds = array<i64: 1, 32, 32>}, {transform_indices = @transform_12, window_bounds = array<i64: 1, 1, 32>}, {transform_indices = @transform_13, window_bounds = array<i64: 1, 1, 32>}, {transform_indices = @transform_14, window_bounds = array<i64: 1, 1, 32>}, {transform_indices = @transform_15, window_bounds = array<i64: 1, 32, 32>}, {transform_indices = @transform_16, window_bounds = array<i64: 1, 1, 32>}, {transform_indices = @transform_17, window_bounds = array<i64: 1, 32, 32>}, {transform_indices = @transform_18, window_bounds = array<i64: 1, 1, 32>}, {pipeline_mode = #tpu.pipeline_mode<synchronous>, transform_indices = @transform_19, window_bounds = array<i64: 1, 32>}, {pipeline_mode = #tpu.pipeline_mode<synchronous>, transform_indices = @transform_20, window_bounds = array<i64: 1, 32>}, {transform_indices = @transform_21, window_bounds = array<i64: 2, 8, 32>}]} {
    %c0 = arith.constant 0 : index
    %c0_0 = arith.constant 0 : index
    %c0_1 = arith.constant 0 : index
    %0 = vector.load %arg4[%c0, %c0_0, %c0_1] : memref<2x8x1xf32, #tpu.memory_space<vmem>>, vector<2x8x1xf32>
    %c0_i32 = arith.constant 0 : i32
    %1 = arith.cmpi eq, %arg1, %c0_i32 : i32
    %2 = arith.extui %1 : i1 to i32
    %c0_i32_2 = arith.constant 0 : i32
    %3 = arith.cmpi ne, %2, %c0_i32_2 : i32
    scf.if %3 {
      %c0_79 = arith.constant 0 : index
      %c0_80 = arith.constant 0 : index
      %c0_81 = arith.constant 0 : index
      %151 = vector.load %arg2[%c0_79, %c0_80, %c0_81] : memref<2x8x32xf32, #tpu.memory_space<vmem>>, vector<2x8x32xf32>
      %cst_82 = arith.constant 5.65685415 : f32
      %152 = vector.broadcast %cst_82 : f32 to vector<2x8x32xf32>
      %153 = arith.mulf %151, %152 : vector<2x8x32xf32>
      %c0_83 = arith.constant 0 : index
      %c0_84 = arith.constant 0 : index
      %c0_85 = arith.constant 0 : index
      %154 = vector.load %arg3[%c0_83, %c0_84, %c0_85] : memref<2x8x32xf32, #tpu.memory_space<vmem>>, vector<2x8x32xf32>
      %155 = arith.addf %153, %154 : vector<2x8x32xf32>
      %156 = vector.broadcast %0 : vector<2x8x1xf32> to vector<2x8x32xf32>
      %157 = arith.mulf %155, %156 : vector<2x8x32xf32>
      %c0_86 = arith.constant 0 : index
      %c0_87 = arith.constant 0 : index
      %c0_88 = arith.constant 0 : index
      %158 = vector.load %arg23[%c0_86, %c0_87, %c0_88] : memref<2x8x32xf32, #tpu.memory_space<vmem>>, vector<2x8x32xf32>
      tpu.vector_store %arg23[%c0_86, %c0_87, %c0_88], %157 {strides = array<i32>} : memref<2x8x32xf32, #tpu.memory_space<vmem>>, vector<2x8x32xf32>,
    } else {
    }
    %c0_3 = arith.constant 0 : index
    %c0_4 = arith.constant 0 : index
    %c0_5 = arith.constant 0 : index
    %4 = vector.load %arg23[%c0_3, %c0_4, %c0_5] : memref<2x8x32xf32, #tpu.memory_space<vmem>>, vector<2x8x32xf32>
    %5 = vector.shape_cast %4 : vector<2x8x32xf32> to vector<16x32xf32>
    %c0_6 = arith.constant 0 : index
    %c0_7 = arith.constant 0 : index
    %c0_8 = arith.constant 0 : index
    %6 = vector.load %arg5[%c0_6, %c0_7, %c0_8] : memref<1x1x32xf32, #tpu.memory_space<vmem>>, vector<1x1x32xf32>
    %7 = vector.shape_cast %6 : vector<1x1x32xf32> to vector<1x32xf32>
    %c0_9 = arith.constant 0 : index
    %c0_10 = arith.constant 0 : index
    %c0_11 = arith.constant 0 : index
    %8 = vector.load %arg6[%c0_9, %c0_10, %c0_11] : memref<1x1x32xf32, #tpu.memory_space<vmem>>, vector<1x1x32xf32>
    %9 = vector.shape_cast %8 : vector<1x1x32xf32> to vector<1x32xf32>
    %cst = arith.constant dense<0.000000e+00> : vector<16xf32>
    %10 = vector.multi_reduction <add>, %5, %cst [1] : vector<16x32xf32> to vector<16xf32>
    %11 = vector.shape_cast %10 : vector<16xf32> to vector<16x1xf32>
    %cst_12 = arith.constant 3.200000e+01 : f32
    %12 = vector.broadcast %cst_12 : f32 to vector<16x1xf32>
    %13 = arith.divf %11, %12 : vector<16x1xf32>
    %14 = vector.broadcast %13 : vector<16x1xf32> to vector<16x32xf32>
    %15 = arith.subf %5, %14 : vector<16x32xf32>
    %16 = arith.mulf %15, %15 : vector<16x32xf32>
    %cst_13 = arith.constant dense<0.000000e+00> : vector<16xf32>
    %17 = vector.multi_reduction <add>, %16, %cst_13 [1] : vector<16x32xf32> to vector<16xf32>
    %18 = vector.shape_cast %17 : vector<16xf32> to vector<16x1xf32>
    %cst_14 = arith.constant 3.200000e+01 : f32
    %19 = vector.broadcast %cst_14 : f32 to vector<16x1xf32>
    %20 = arith.divf %18, %19 : vector<16x1xf32>
    %21 = vector.broadcast %13 : vector<16x1xf32> to vector<16x32xf32>
    %22 = arith.subf %5, %21 : vector<16x32xf32>
    %cst_15 = arith.constant 9.99999993E-9 : f32
    %23 = vector.broadcast %cst_15 : f32 to vector<16x1xf32>
    %24 = arith.addf %20, %23 : vector<16x1xf32>
    %25 = math.rsqrt %24 : vector<16x1xf32>
    %26 = vector.broadcast %25 : vector<16x1xf32> to vector<16x32xf32>
    %27 = arith.mulf %22, %26 : vector<16x32xf32>
    %28 = vector.broadcast %7 : vector<1x32xf32> to vector<16x32xf32>
    %29 = arith.mulf %27, %28 : vector<16x32xf32>
    %30 = vector.broadcast %9 : vector<1x32xf32> to vector<16x32xf32>
    %31 = arith.addf %29, %30 : vector<16x32xf32>
    %32 = arith.truncf %31 : vector<16x32xf32> to vector<16x32xbf16>
    %c0_16 = arith.constant 0 : index
    %c0_17 = arith.constant 0 : index
    %c0_18 = arith.constant 0 : index
    %33 = vector.load %arg7[%c0_16, %c0_17, %c0_18] : memref<1x32x32xbf16, #tpu.memory_space<vmem>>, vector<1x32x32xbf16>
    %34 = vector.shape_cast %33 : vector<1x32x32xbf16> to vector<32x32xbf16>
    %cst_19 = arith.constant dense<0.000000e+00> : vector<16x32xf32>
    %35 = tpu.matmul %32, %34, %cst_19 {dimension_numbers = #tpu.dot_dimension_numbers<[1], [0], [0], [1], [0, 0, 1, 1], [], []>} : vector<16x32xbf16>, vector<32x32xbf16>, vector<16x32xf32> -> vector<16x32xf32>
    %c0_20 = arith.constant 0 : index
    %c0_21 = arith.constant 0 : index
    %c0_22 = arith.constant 0 : index
    %36 = vector.load %arg10[%c0_20, %c0_21, %c0_22] : memref<1x1x32xf32, #tpu.memory_space<vmem>>, vector<1x1x32xf32>
    %37 = vector.shape_cast %36 : vector<1x1x32xf32> to vector<1x32xf32>
    %38 = vector.broadcast %37 : vector<1x32xf32> to vector<16x32xf32>
    %39 = arith.addf %35, %38 : vector<16x32xf32>
    %40 = arith.truncf %5 : vector<16x32xf32> to vector<16x32xbf16>
    %c0_23 = arith.constant 0 : index
    %c0_24 = arith.constant 0 : index
    %c0_25 = arith.constant 0 : index
    %41 = vector.load %arg8[%c0_23, %c0_24, %c0_25] : memref<1x32x32xbf16, #tpu.memory_space<vmem>>, vector<1x32x32xbf16>
    %42 = vector.shape_cast %41 : vector<1x32x32xbf16> to vector<32x32xbf16>
    %cst_26 = arith.constant dense<0.000000e+00> : vector<16x32xf32>
    %43 = tpu.matmul %40, %42, %cst_26 {dimension_numbers = #tpu.dot_dimension_numbers<[1], [0], [0], [1], [0, 0, 1, 1], [], []>} : vector<16x32xbf16>, vector<32x32xbf16>, vector<16x32xf32> -> vector<16x32xf32>
    %c0_27 = arith.constant 0 : index
    %c0_28 = arith.constant 0 : index
    %c0_29 = arith.constant 0 : index
    %44 = vector.load %arg11[%c0_27, %c0_28, %c0_29] : memref<1x1x32xf32, #tpu.memory_space<vmem>>, vector<1x1x32xf32>
    %45 = vector.shape_cast %44 : vector<1x1x32xf32> to vector<1x32xf32>
    %46 = vector.broadcast %45 : vector<1x32xf32> to vector<16x32xf32>
    %47 = arith.addf %43, %46 : vector<16x32xf32>
    %48 = arith.truncf %5 : vector<16x32xf32> to vector<16x32xbf16>
    %c0_30 = arith.constant 0 : index
    %c0_31 = arith.constant 0 : index
    %c0_32 = arith.constant 0 : index
    %49 = vector.load %arg9[%c0_30, %c0_31, %c0_32] : memref<1x32x32xbf16, #tpu.memory_space<vmem>>, vector<1x32x32xbf16>
    %50 = vector.shape_cast %49 : vector<1x32x32xbf16> to vector<32x32xbf16>
    %cst_33 = arith.constant dense<0.000000e+00> : vector<16x32xf32>
    %51 = tpu.matmul %48, %50, %cst_33 {dimension_numbers = #tpu.dot_dimension_numbers<[1], [0], [0], [1], [0, 0, 1, 1], [], []>} : vector<16x32xbf16>, vector<32x32xbf16>, vector<16x32xf32> -> vector<16x32xf32>
    %c0_34 = arith.constant 0 : index
    %c0_35 = arith.constant 0 : index
    %c0_36 = arith.constant 0 : index
    %52 = vector.load %arg12[%c0_34, %c0_35, %c0_36] : memref<1x1x32xf32, #tpu.memory_space<vmem>>, vector<1x1x32xf32>
    %53 = vector.shape_cast %52 : vector<1x1x32xf32> to vector<1x32xf32>
    %54 = vector.broadcast %53 : vector<1x32xf32> to vector<16x32xf32>
    %55 = arith.addf %51, %54 : vector<16x32xf32>
    %56 = vector.shape_cast %39 : vector<16x32xf32> to vector<2x8x32xf32>
    %57 = vector.extract_strided_slice %56 {offsets = [0, 0, 0], sizes = [2, 8, 16], strides = [1, 1, 1]} : vector<2x8x32xf32> to vector<2x8x16xf32>
    %58 = vector.extract_strided_slice %56 {offsets = [0, 0, 16], sizes = [2, 8, 16], strides = [1, 1, 1]} : vector<2x8x32xf32> to vector<2x8x16xf32>
    %59 = tpu.concatenate %57, %58 in 0 : vector<2x8x16xf32>, vector<2x8x16xf32> -> vector<4x8x16xf32>
    %60 = arith.truncf %59 : vector<4x8x16xf32> to vector<4x8x16xbf16>
    %61 = vector.shape_cast %47 : vector<16x32xf32> to vector<2x8x32xf32>
    %62 = vector.extract_strided_slice %61 {offsets = [0, 0, 0], sizes = [2, 8, 16], strides = [1, 1, 1]} : vector<2x8x32xf32> to vector<2x8x16xf32>
    %63 = vector.extract_strided_slice %61 {offsets = [0, 0, 16], sizes = [2, 8, 16], strides = [1, 1, 1]} : vector<2x8x32xf32> to vector<2x8x16xf32>
    %64 = tpu.concatenate %62, %63 in 0 : vector<2x8x16xf32>, vector<2x8x16xf32> -> vector<4x8x16xf32>
    %65 = arith.truncf %64 : vector<4x8x16xf32> to vector<4x8x16xbf16>
    %66 = vector.shape_cast %55 : vector<16x32xf32> to vector<2x8x32xf32>
    %67 = vector.extract_strided_slice %66 {offsets = [0, 0, 0], sizes = [2, 8, 16], strides = [1, 1, 1]} : vector<2x8x32xf32> to vector<2x8x16xf32>
    %68 = vector.extract_strided_slice %66 {offsets = [0, 0, 16], sizes = [2, 8, 16], strides = [1, 1, 1]} : vector<2x8x32xf32> to vector<2x8x16xf32>
    %69 = tpu.concatenate %67, %68 in 0 : vector<2x8x16xf32>, vector<2x8x16xf32> -> vector<4x8x16xf32>
    %70 = arith.truncf %69 : vector<4x8x16xf32> to vector<4x8x16xbf16>
    "tpu.trace_start"() <{level = 10 : i32, message = "bqd,bkd->bqk"}> : () -> ()
    %cst_37 = arith.constant dense<0.000000e+00> : vector<4x8x8xf32>
    %71 = tpu.matmul %60, %65, %cst_37 {dimension_numbers = #tpu.dot_dimension_numbers<[2], [2], [1], [1], [0, 0, 0, 1, 1, 1], [0], [0]>} : vector<4x8x16xbf16>, vector<4x8x16xbf16>, vector<4x8x8xf32> -> vector<4x8x8xf32>
    "tpu.trace_stop"() : () -> ()
    %cst_38 = arith.constant 2.500000e-01 : f32
    %72 = vector.broadcast %cst_38 : f32 to vector<4x8x8xf32>
    %73 = arith.mulf %71, %72 : vector<4x8x8xf32>
    %cst_39 = arith.constant dense<0xFF800000> : vector<4x8xf32>
    %74 = vector.multi_reduction <maximumf>, %73, %cst_39 [2] : vector<4x8x8xf32> to vector<4x8xf32>
    %75 = vector.shape_cast %74 : vector<4x8xf32> to vector<4x8x1xf32>
    %76 = vector.broadcast %75 : vector<4x8x1xf32> to vector<4x8x8xf32>
    %77 = arith.subf %73, %76 : vector<4x8x8xf32>
    %78 = math.exp %77 : vector<4x8x8xf32>
    %cst_40 = arith.constant dense<0.000000e+00> : vector<4x8xf32>
    %79 = vector.multi_reduction <add>, %78, %cst_40 [2] : vector<4x8x8xf32> to vector<4x8xf32>
    %80 = vector.shape_cast %79 : vector<4x8xf32> to vector<4x8x1xf32>
    %81 = tpu.reciprocal %80 {approx = true} : vector<4x8x1xf32> -> vector<4x8x1xf32>
    %82 = vector.broadcast %81 : vector<4x8x1xf32> to vector<4x8x8xf32>
    %83 = arith.mulf %78, %82 : vector<4x8x8xf32>
    %84 = arith.truncf %83 : vector<4x8x8xf32> to vector<4x8x8xbf16>
    "tpu.trace_start"() <{level = 10 : i32, message = "bqk,bkd->bqd"}> : () -> ()
    %cst_41 = arith.constant dense<0.000000e+00> : vector<4x8x16xf32>
    %85 = tpu.matmul %84, %70, %cst_41 {dimension_numbers = #tpu.dot_dimension_numbers<[2], [1], [1], [2], [0, 0, 0, 1, 1, 2], [0], [0]>} : vector<4x8x8xbf16>, vector<4x8x16xbf16>, vector<4x8x16xf32> -> vector<4x8x16xf32>
    "tpu.trace_stop"() : () -> ()
    %86 = vector.extract_strided_slice %85 {offsets = [0, 0, 0], sizes = [2, 8, 16], strides = [1, 1, 1]} : vector<4x8x16xf32> to vector<2x8x16xf32>
    %87 = vector.extract_strided_slice %85 {offsets = [2, 0, 0], sizes = [2, 8, 16], strides = [1, 1, 1]} : vector<4x8x16xf32> to vector<2x8x16xf32>
    %88 = tpu.concatenate %86, %87 in 2 : vector<2x8x16xf32>, vector<2x8x16xf32> -> vector<2x8x32xf32>
    %89 = vector.shape_cast %88 : vector<2x8x32xf32> to vector<16x32xf32>
    %90 = arith.truncf %89 : vector<16x32xf32> to vector<16x32xbf16>
    %c0_42 = arith.constant 0 : index
    %c0_43 = arith.constant 0 : index
    %c0_44 = arith.constant 0 : index
    %91 = vector.load %arg13[%c0_42, %c0_43, %c0_44] : memref<1x32x32xbf16, #tpu.memory_space<vmem>>, vector<1x32x32xbf16>
    %92 = vector.shape_cast %91 : vector<1x32x32xbf16> to vector<32x32xbf16>
    %cst_45 = arith.constant dense<0.000000e+00> : vector<16x32xf32>
    %93 = tpu.matmul %90, %92, %cst_45 {dimension_numbers = #tpu.dot_dimension_numbers<[1], [0], [0], [1], [0, 0, 1, 1], [], []>} : vector<16x32xbf16>, vector<32x32xbf16>, vector<16x32xf32> -> vector<16x32xf32>
    %c0_46 = arith.constant 0 : index
    %c0_47 = arith.constant 0 : index
    %c0_48 = arith.constant 0 : index
    %94 = vector.load %arg14[%c0_46, %c0_47, %c0_48] : memref<1x1x32xf32, #tpu.memory_space<vmem>>, vector<1x1x32xf32>
    %95 = vector.shape_cast %94 : vector<1x1x32xf32> to vector<1x32xf32>
    %96 = vector.broadcast %95 : vector<1x32xf32> to vector<16x32xf32>
    %97 = arith.addf %93, %96 : vector<16x32xf32>
    %98 = arith.addf %31, %97 : vector<16x32xf32>
    %c0_49 = arith.constant 0 : index
    %c0_50 = arith.constant 0 : index
    %c0_51 = arith.constant 0 : index
    %99 = vector.load %arg15[%c0_49, %c0_50, %c0_51] : memref<1x1x32xf32, #tpu.memory_space<vmem>>, vector<1x1x32xf32>
    %100 = vector.shape_cast %99 : vector<1x1x32xf32> to vector<1x32xf32>
    %c0_52 = arith.constant 0 : index
    %c0_53 = arith.constant 0 : index
    %c0_54 = arith.constant 0 : index
    %101 = vector.load %arg16[%c0_52, %c0_53, %c0_54] : memref<1x1x32xf32, #tpu.memory_space<vmem>>, vector<1x1x32xf32>
    %102 = vector.shape_cast %101 : vector<1x1x32xf32> to vector<1x32xf32>
    %cst_55 = arith.constant dense<0.000000e+00> : vector<16xf32>
    %103 = vector.multi_reduction <add>, %98, %cst_55 [1] : vector<16x32xf32> to vector<16xf32>
    %104 = vector.shape_cast %103 : vector<16xf32> to vector<16x1xf32>
    %cst_56 = arith.constant 3.200000e+01 : f32
    %105 = vector.broadcast %cst_56 : f32 to vector<16x1xf32>
    %106 = arith.divf %104, %105 : vector<16x1xf32>
    %107 = vector.broadcast %106 : vector<16x1xf32> to vector<16x32xf32>
    %108 = arith.subf %98, %107 : vector<16x32xf32>
    %109 = arith.mulf %108, %108 : vector<16x32xf32>
    %cst_57 = arith.constant dense<0.000000e+00> : vector<16xf32>
    %110 = vector.multi_reduction <add>, %109, %cst_57 [1] : vector<16x32xf32> to vector<16xf32>
    %111 = vector.shape_cast %110 : vector<16xf32> to vector<16x1xf32>
    %cst_58 = arith.constant 3.200000e+01 : f32
    %112 = vector.broadcast %cst_58 : f32 to vector<16x1xf32>
    %113 = arith.divf %111, %112 : vector<16x1xf32>
    %114 = vector.broadcast %106 : vector<16x1xf32> to vector<16x32xf32>
    %115 = arith.subf %98, %114 : vector<16x32xf32>
    %cst_59 = arith.constant 9.99999993E-9 : f32
    %116 = vector.broadcast %cst_59 : f32 to vector<16x1xf32>
    %117 = arith.addf %113, %116 : vector<16x1xf32>
    %118 = math.rsqrt %117 : vector<16x1xf32>
    %119 = vector.broadcast %118 : vector<16x1xf32> to vector<16x32xf32>
    %120 = arith.mulf %115, %119 : vector<16x32xf32>
    %121 = vector.broadcast %100 : vector<1x32xf32> to vector<16x32xf32>
    %122 = arith.mulf %120, %121 : vector<16x32xf32>
    %123 = vector.broadcast %102 : vector<1x32xf32> to vector<16x32xf32>
    %124 = arith.addf %122, %123 : vector<16x32xf32>
    %125 = arith.truncf %124 : vector<16x32xf32> to vector<16x32xbf16>
    %c0_60 = arith.constant 0 : index
    %c0_61 = arith.constant 0 : index
    %c0_62 = arith.constant 0 : index
    %126 = vector.load %arg17[%c0_60, %c0_61, %c0_62] : memref<1x32x32xbf16, #tpu.memory_space<vmem>>, vector<1x32x32xbf16>
    %127 = vector.shape_cast %126 : vector<1x32x32xbf16> to vector<32x32xbf16>
    %cst_63 = arith.constant dense<0.000000e+00> : vector<16x32xf32>
    %128 = tpu.matmul %125, %127, %cst_63 {dimension_numbers = #tpu.dot_dimension_numbers<[1], [0], [0], [1], [0, 0, 1, 1], [], []>} : vector<16x32xbf16>, vector<32x32xbf16>, vector<16x32xf32> -> vector<16x32xf32>
    %c0_64 = arith.constant 0 : index
    %c0_65 = arith.constant 0 : index
    %c0_66 = arith.constant 0 : index
    %129 = vector.load %arg18[%c0_64, %c0_65, %c0_66] : memref<1x1x32xf32, #tpu.memory_space<vmem>>, vector<1x1x32xf32>
    %130 = vector.shape_cast %129 : vector<1x1x32xf32> to vector<1x32xf32>
    %131 = vector.broadcast %130 : vector<1x32xf32> to vector<16x32xf32>
    %132 = arith.addf %128, %131 : vector<16x32xf32>
    %cst_67 = arith.constant 0.000000e+00 : f32
    %133 = vector.broadcast %cst_67 : f32 to vector<16x32xf32>
    %134 = arith.maximumf %132, %133 : vector<16x32xf32>
    %135 = arith.truncf %134 : vector<16x32xf32> to vector<16x32xbf16>
    %c0_68 = arith.constant 0 : index
    %c0_69 = arith.constant 0 : index
    %c0_70 = arith.constant 0 : index
    %136 = vector.load %arg19[%c0_68, %c0_69, %c0_70] : memref<1x32x32xbf16, #tpu.memory_space<vmem>>, vector<1x32x32xbf16>
    %137 = vector.shape_cast %136 : vector<1x32x32xbf16> to vector<32x32xbf16>
    %cst_71 = arith.constant dense<0.000000e+00> : vector<16x32xf32>
    %138 = tpu.matmul %135, %137, %cst_71 {dimension_numbers = #tpu.dot_dimension_numbers<[1], [0], [0], [1], [0, 0, 1, 1], [], []>} : vector<16x32xbf16>, vector<32x32xbf16>, vector<16x32xf32> -> vector<16x32xf32>
    %c0_72 = arith.constant 0 : index
    %c0_73 = arith.constant 0 : index
    %c0_74 = arith.constant 0 : index
    %139 = vector.load %arg20[%c0_72, %c0_73, %c0_74] : memref<1x1x32xf32, #tpu.memory_space<vmem>>, vector<1x1x32xf32>
    %140 = vector.shape_cast %139 : vector<1x1x32xf32> to vector<1x32xf32>
    %141 = vector.broadcast %140 : vector<1x32xf32> to vector<16x32xf32>
    %142 = arith.addf %138, %141 : vector<16x32xf32>
    %143 = arith.addf %124, %142 : vector<16x32xf32>
    %144 = vector.shape_cast %143 : vector<16x32xf32> to vector<2x8x32xf32>
    %145 = vector.broadcast %0 : vector<2x8x1xf32> to vector<2x8x32xf32>
    %146 = arith.mulf %144, %145 : vector<2x8x32xf32>
    %c0_75 = arith.constant 0 : index
    %c0_76 = arith.constant 0 : index
    %c0_77 = arith.constant 0 : index
    %147 = vector.load %arg23[%c0_75, %c0_76, %c0_77] : memref<2x8x32xf32, #tpu.memory_space<vmem>>, vector<2x8x32xf32>
    tpu.vector_store %arg23[%c0_75, %c0_76, %c0_77], %146 {strides = array<i32>} : memref<2x8x32xf32, #tpu.memory_space<vmem>>, vector<2x8x32xf32>,
    %c1_i32 = arith.constant 1 : i32
    %148 = arith.cmpi eq, %arg1, %c1_i32 : i32
    %149 = arith.extui %148 : i1 to i32
    %c0_i32_78 = arith.constant 0 : i32
    %150 = arith.cmpi ne, %149, %c0_i32_78 : i32
    scf.if %150 {
      %151 = vector.shape_cast %146 : vector<2x8x32xf32> to vector<16x32xf32>
      %c0_79 = arith.constant 0 : index
      %c0_80 = arith.constant 0 : index
      %152 = vector.load %arg21[%c0_79, %c0_80] : memref<1x32xf32, #tpu.memory_space<vmem>>, vector<1x32xf32>
      %c0_81 = arith.constant 0 : index
      %c0_82 = arith.constant 0 : index
      %153 = vector.load %arg22[%c0_81, %c0_82] : memref<1x32xf32, #tpu.memory_space<vmem>>, vector<1x32xf32>
      %cst_83 = arith.constant dense<0.000000e+00> : vector<16xf32>
      %154 = vector.multi_reduction <add>, %151, %cst_83 [1] : vector<16x32xf32> to vector<16xf32>
      %155 = vector.shape_cast %154 : vector<16xf32> to vector<16x1xf32>
      %cst_84 = arith.constant 3.200000e+01 : f32
      %156 = vector.broadcast %cst_84 : f32 to vector<16x1xf32>
      %157 = arith.divf %155, %156 : vector<16x1xf32>
      %158 = vector.broadcast %157 : vector<16x1xf32> to vector<16x32xf32>
      %159 = arith.subf %151, %158 : vector<16x32xf32>
      %160 = arith.mulf %159, %159 : vector<16x32xf32>
      %cst_85 = arith.constant dense<0.000000e+00> : vector<16xf32>
      %161 = vector.multi_reduction <add>, %160, %cst_85 [1] : vector<16x32xf32> to vector<16xf32>
      %162 = vector.shape_cast %161 : vector<16xf32> to vector<16x1xf32>
      %cst_86 = arith.constant 3.200000e+01 : f32
      %163 = vector.broadcast %cst_86 : f32 to vector<16x1xf32>
      %164 = arith.divf %162, %163 : vector<16x1xf32>
      %165 = vector.broadcast %157 : vector<16x1xf32> to vector<16x32xf32>
      %166 = arith.subf %151, %165 : vector<16x32xf32>
      %cst_87 = arith.constant 9.99999993E-9 : f32
      %167 = vector.broadcast %cst_87 : f32 to vector<16x1xf32>
      %168 = arith.addf %164, %167 : vector<16x1xf32>
      %169 = math.rsqrt %168 : vector<16x1xf32>
      %170 = vector.broadcast %169 : vector<16x1xf32> to vector<16x32xf32>
      %171 = arith.mulf %166, %170 : vector<16x32xf32>
      %172 = vector.broadcast %152 : vector<1x32xf32> to vector<16x32xf32>
      %173 = arith.mulf %171, %172 : vector<16x32xf32>
      %174 = vector.broadcast %153 : vector<1x32xf32> to vector<16x32xf32>
      %175 = arith.addf %173, %174 : vector<16x32xf32>
      %176 = vector.shape_cast %175 : vector<16x32xf32> to vector<2x8x32xf32>
      %c0_88 = arith.constant 0 : index
      %c0_89 = arith.constant 0 : index
      %c0_90 = arith.constant 0 : index
      %177 = vector.load %arg23[%c0_88, %c0_89, %c0_90] : memref<2x8x32xf32, #tpu.memory_space<vmem>>, vector<2x8x32xf32>
      tpu.vector_store %arg23[%c0_88, %c0_89, %c0_90], %176 {strides = array<i32>} : memref<2x8x32xf32, #tpu.memory_space<vmem>>, vector<2x8x32xf32>,
    } else {
    }
    return
  }
  func.func @transform_0(%arg0: i32, %arg1: i32) -> (i32, i32, i32) {
    %c0_i32 = arith.constant 0 : i32
    %c0_i32_0 = arith.constant 0 : i32
    %c0_i32_1 = arith.constant 0 : i32
    return %arg0, %c0_i32, %c0_i32_0 : i32, i32, i32
  }
  func.func @transform_1(%arg0: i32, %arg1: i32) -> (i32, i32, i32) {
    %c0_i32 = arith.constant 0 : i32
    %c0_i32_0 = arith.constant 0 : i32
    %c0_i32_1 = arith.constant 0 : i32
    return %arg0, %c0_i32, %c0_i32_0 : i32, i32, i32
  }
  func.func @transform_2(%arg0: i32, %arg1: i32) -> (i32, i32, i32) {
    %c0_i32 = arith.constant 0 : i32
    %c0_i32_0 = arith.constant 0 : i32
    %c0_i32_1 = arith.constant 0 : i32
    return %arg0, %c0_i32, %c0_i32_0 : i32, i32, i32
  }
  func.func @transform_3(%arg0: i32, %arg1: i32) -> (i32, i32, i32) {
    %c0_i32 = arith.constant 0 : i32
    %c0_i32_0 = arith.constant 0 : i32
    %c0_i32_1 = arith.constant 0 : i32
    return %arg1, %c0_i32, %c0_i32_0 : i32, i32, i32
  }
  func.func @transform_4(%arg0: i32, %arg1: i32) -> (i32, i32, i32) {
    %c0_i32 = arith.constant 0 : i32
    %c0_i32_0 = arith.constant 0 : i32
    %c0_i32_1 = arith.constant 0 : i32
    return %arg1, %c0_i32, %c0_i32_0 : i32, i32, i32
  }
  func.func @transform_5(%arg0: i32, %arg1: i32) -> (i32, i32, i32) {
    %c0_i32 = arith.constant 0 : i32
    %c0_i32_0 = arith.constant 0 : i32
    %c0_i32_1 = arith.constant 0 : i32
    return %arg1, %c0_i32, %c0_i32_0 : i32, i32, i32
  }
  func.func @transform_6(%arg0: i32, %arg1: i32) -> (i32, i32, i32) {
    %c0_i32 = arith.constant 0 : i32
    %c0_i32_0 = arith.constant 0 : i32
    %c0_i32_1 = arith.constant 0 : i32
    return %arg1, %c0_i32, %c0_i32_0 : i32, i32, i32
  }
  func.func @transform_7(%arg0: i32, %arg1: i32) -> (i32, i32, i32) {
    %c0_i32 = arith.constant 0 : i32
    %c0_i32_0 = arith.constant 0 : i32
    %c0_i32_1 = arith.constant 0 : i32
    return %arg1, %c0_i32, %c0_i32_0 : i32, i32, i32
  }
  func.func @transform_8(%arg0: i32, %arg1: i32) -> (i32, i32, i32) {
    %c0_i32 = arith.constant 0 : i32
    %c0_i32_0 = arith.constant 0 : i32
    %c0_i32_1 = arith.constant 0 : i32
    return %arg1, %c0_i32, %c0_i32_0 : i32, i32, i32
  }
  func.func @transform_9(%arg0: i32, %arg1: i32) -> (i32, i32, i32) {
    %c0_i32 = arith.constant 0 : i32
    %c0_i32_0 = arith.constant 0 : i32
    %c0_i32_1 = arith.constant 0 : i32
    return %arg1, %c0_i32, %c0_i32_0 : i32, i32, i32
  }
  func.func @transform_10(%arg0: i32, %arg1: i32) -> (i32, i32, i32) {
    %c0_i32 = arith.constant 0 : i32
    %c0_i32_0 = arith.constant 0 : i32
    %c0_i32_1 = arith.constant 0 : i32
    return %arg1, %c0_i32, %c0_i32_0 : i32, i32, i32
  }
  func.func @transform_11(%arg0: i32, %arg1: i32) -> (i32, i32, i32) {
    %c0_i32 = arith.constant 0 : i32
    %c0_i32_0 = arith.constant 0 : i32
    %c0_i32_1 = arith.constant 0 : i32
    return %arg1, %c0_i32, %c0_i32_0 : i32, i32, i32
  }
  func.func @transform_12(%arg0: i32, %arg1: i32) -> (i32, i32, i32) {
    %c0_i32 = arith.constant 0 : i32
    %c0_i32_0 = arith.constant 0 : i32
    %c0_i32_1 = arith.constant 0 : i32
    return %arg1, %c0_i32, %c0_i32_0 : i32, i32, i32
  }
  func.func @transform_13(%arg0: i32, %arg1: i32) -> (i32, i32, i32) {
    %c0_i32 = arith.constant 0 : i32
    %c0_i32_0 = arith.constant 0 : i32
    %c0_i32_1 = arith.constant 0 : i32
    return %arg1, %c0_i32, %c0_i32_0 : i32, i32, i32
  }
  func.func @transform_14(%arg0: i32, %arg1: i32) -> (i32, i32, i32) {
    %c0_i32 = arith.constant 0 : i32
    %c0_i32_0 = arith.constant 0 : i32
    %c0_i32_1 = arith.constant 0 : i32
    return %arg1, %c0_i32, %c0_i32_0 : i32, i32, i32
  }
  func.func @transform_15(%arg0: i32, %arg1: i32) -> (i32, i32, i32) {
    %c0_i32 = arith.constant 0 : i32
    %c0_i32_0 = arith.constant 0 : i32
    %c0_i32_1 = arith.constant 0 : i32
    return %arg1, %c0_i32, %c0_i32_0 : i32, i32, i32
  }
  func.func @transform_16(%arg0: i32, %arg1: i32) -> (i32, i32, i32) {
    %c0_i32 = arith.constant 0 : i32
    %c0_i32_0 = arith.constant 0 : i32
    %c0_i32_1 = arith.constant 0 : i32
    return %arg1, %c0_i32, %c0_i32_0 : i32, i32, i32
  }
  func.func @transform_17(%arg0: i32, %arg1: i32) -> (i32, i32, i32) {
    %c0_i32 = arith.constant 0 : i32
    %c0_i32_0 = arith.constant 0 : i32
    %c0_i32_1 = arith.constant 0 : i32
    return %arg1, %c0_i32, %c0_i32_0 : i32, i32, i32
  }
  func.func @transform_18(%arg0: i32, %arg1: i32) -> (i32, i32, i32) {
    %c0_i32 = arith.constant 0 : i32
    %c0_i32_0 = arith.constant 0 : i32
    %c0_i32_1 = arith.constant 0 : i32
    return %arg1, %c0_i32, %c0_i32_0 : i32, i32, i32
  }
  func.func @transform_19(%arg0: i32, %arg1: i32) -> (i32, i32) {
    %c0_i32 = arith.constant 0 : i32
    %c0_i32_0 = arith.constant 0 : i32
    %c0_i32_1 = arith.constant 0 : i32
    return %c0_i32, %c0_i32_0 : i32, i32
  }
  func.func @transform_20(%arg0: i32, %arg1: i32) -> (i32, i32) {
    %c0_i32 = arith.constant 0 : i32
    %c0_i32_0 = arith.constant 0 : i32
    %c0_i32_1 = arith.constant 0 : i32
    return %c0_i32, %c0_i32_0 : i32, i32
  }
  func.func @transform_21(%arg0: i32, %arg1: i32) -> (i32, i32, i32) {
    %c0_i32 = arith.constant 0 : i32
    %c0_i32_0 = arith.constant 0 : i32
    %c0_i32_1 = arith.constant 0 : i32
    return %arg0, %c0_i32, %c0_i32_0 : i32, i32, i32
  }
}

</mosaic_0001>

<llo_original>
// kernel: bert4rec_forward.1
$region0: #{bert4rec_forward.1}
  #allocation0 [shape = 'u32[]', space=smem, size = 0x4, offset = 0x4, fixed_abs, tag = 'smem constant byte address 0x4 - core index']
  #allocation1 [shape = 'u32[144,128]{1,0:T(1,128)}', space=vmem, size = 0x12000, scoped, tag = 'internal scratch']
  %s0 = inlined_call_operand.vmem [shape: f32[2,8,32], index: 0, kind: input, shape index: {}]
  %s1 = inlined_call_operand.vmem [shape: f32[2,8,32], index: 1, kind: input, shape index: {}]
  %s2 = inlined_call_operand.vmem [shape: f32[2,8,1], index: 2, kind: input, shape index: {}]
  %s3 = inlined_call_operand.vmem [shape: f32[2,1,32], index: 3, kind: input, shape index: {}]
  %s4 = inlined_call_operand.vmem [shape: f32[2,1,32], index: 4, kind: input, shape index: {}]
  %s5 = inlined_call_operand.vmem [shape: bf16[2,32,32], index: 5, kind: input, shape index: {}]
  %s6 = inlined_call_operand.vmem [shape: bf16[2,32,32], index: 6, kind: input, shape index: {}]
  %s7 = inlined_call_operand.vmem [shape: bf16[2,32,32], index: 7, kind: input, shape index: {}]
  %s8 = inlined_call_operand.vmem [shape: f32[2,1,32], index: 8, kind: input, shape index: {}]
  %s9 = inlined_call_operand.vmem [shape: f32[2,1,32], index: 9, kind: input, shape index: {}]
  %s10 = inlined_call_operand.vmem [shape: f32[2,1,32], index: 10, kind: input, shape index: {}]
  %s11 = inlined_call_operand.vmem [shape: bf16[2,32,32], index: 11, kind: input, shape index: {}]
  %s12 = inlined_call_operand.vmem [shape: f32[2,1,32], index: 12, kind: input, shape index: {}]
  %s13 = inlined_call_operand.vmem [shape: f32[2,1,32], index: 13, kind: input, shape index: {}]
  %s14 = inlined_call_operand.vmem [shape: f32[2,1,32], index: 14, kind: input, shape index: {}]
  %s15 = inlined_call_operand.vmem [shape: bf16[2,32,32], index: 15, kind: input, shape index: {}]
  %s16 = inlined_call_operand.vmem [shape: f32[2,1,32], index: 16, kind: input, shape index: {}]
  %s17 = inlined_call_operand.vmem [shape: bf16[2,32,32], index: 17, kind: input, shape index: {}]
  %s18 = inlined_call_operand.vmem [shape: f32[2,1,32], index: 18, kind: input, shape index: {}]
  %s19 = inlined_call_operand.vmem [shape: f32[1,32], index: 19, kind: input, shape index: {}]
  %s20 = inlined_call_operand.vmem [shape: f32[1,32], index: 20, kind: input, shape index: {}]
  %s21 = inlined_call_operand.vmem [shape: f32[2,8,32], index: 21, kind: output, shape index: {}]
  %s22 = sld [smem:[#allocation0]]
  $region125: #{bert4rec_forward.1} parent=0
    _
  %s24 = ssub.s32 1, %s22
  %s25 = scalar_select 0, %s24, %s22
  loop: start=0, step=1, limit=4
  $region2: #{bert4rec_forward.1} parent=0 // loop_pre_header
    _
  $region3: #{bert4rec_forward.1} parent=0 // loop_header
    %s27 = sphi 0, %s31
    %p28 = scmp.ge.s32.totalorder %s27, 4
    %s34 = sphi 0, %s46
    %s35 = sphi 0, %s42
    %s36 = sphi 0, %s34
    %s37 = sphi 0, %s35
    %s38 = sphi 0, %s36
    %s39 = sphi 0, %s37
    %s49 = sphi 0, %s51
    %s52 = sphi 0, %s49
    %s53 = sphi 0, %s52
    %s69 = sphi 0, %s53
    %s75 = sphi 0, %s77
    %s78 = sphi 0, %s75
    %s79 = sphi 0, %s78
    %s95 = sphi 0, %s79
    %s101 = sphi 0, %s103
    %s104 = sphi 0, %s101
    %s105 = sphi 0, %s104
    %s121 = sphi 0, %s105
    %s127 = sphi 0, %s129
    %s130 = sphi 0, %s127
    %s131 = sphi 0, %s130
    %s147 = sphi 0, %s131
    %s153 = sphi 0, %s155
    %s156 = sphi 0, %s153
    %s157 = sphi 0, %s156
    %s173 = sphi 0, %s157
    %s179 = sphi 0, %s181
    %s182 = sphi 0, %s179
    %s183 = sphi 0, %s182
    %s199 = sphi 0, %s183
    %s205 = sphi 0, %s207
    %s208 = sphi 0, %s205
    %s209 = sphi 0, %s208
    %s225 = sphi 0, %s209
    %s231 = sphi 0, %s233
    %s234 = sphi 0, %s231
    %s235 = sphi 0, %s234
    %s251 = sphi 0, %s235
    %s257 = sphi 0, %s259
    %s260 = sphi 0, %s257
    %s261 = sphi 0, %s260
    %s277 = sphi 0, %s261
    %s283 = sphi 0, %s285
    %s286 = sphi 0, %s283
    %s287 = sphi 0, %s286
    %s303 = sphi 0, %s287
    %s309 = sphi 0, %s311
    %s312 = sphi 0, %s309
    %s313 = sphi 0, %s312
    %s329 = sphi 0, %s313
    %s335 = sphi 0, %s337
    %s338 = sphi 0, %s335
    %s339 = sphi 0, %s338
    %s355 = sphi 0, %s339
    %s361 = sphi 0, %s363
    %s364 = sphi 0, %s361
    %s365 = sphi 0, %s364
    %s381 = sphi 0, %s365
    %s387 = sphi 0, %s389
    %s390 = sphi 0, %s387
    %s391 = sphi 0, %s390
    %s407 = sphi 0, %s391
    %s413 = sphi 0, %s415
    %s416 = sphi 0, %s413
    %s417 = sphi 0, %s416
    %s433 = sphi 0, %s417
    %s439 = sphi 0, %s441
    %s442 = sphi 0, %s439
    %s443 = sphi 0, %s442
    %s459 = sphi 0, %s443
    %s465 = sphi 0, %s467
    %s468 = sphi 0, %s465
    %s469 = sphi 0, %s468
    %s485 = sphi 0, %s469
    %s491 = sphi 0, %s493
    %s494 = sphi 0, %s491
    %s495 = sphi 0, %s494
    %s511 = sphi 0, %s495
    %s517 = sphi 0, %s519
    %s520 = sphi 0, %s517
    %s521 = sphi 0, %s520
    %s537 = sphi 0, %s521
    %s541 = sphi 0, %s541
    %s543 = sphi 0, %s541
    %s544 = sphi 0, %s543
    %s558 = sphi 0, %s544
    %s562 = sphi 0, %s562
    %s564 = sphi 0, %s562
    %s565 = sphi 0, %s564
    %s579 = sphi 0, %s565
    %s585 = sphi 0, %s587
    %s588 = sphi 0, %s585
    %s589 = sphi 0, %s588
    %s605 = sphi 0, %s589
  $region4: #{bert4rec_forward.1} parent=0 // loop_header_branch
    %30 = sbr.rel (%p28) target = $region8
  $region5: #{bert4rec_forward.1} parent=0 // loop_body
    %s32 = ssub.s32 %s27, 1
    %s33 = ssub.s32 %s27, 2
    %s40 = sadd.s32 1, %s35
    %p41 = scmp.ge.s32.totalorder %s40, 2
    %s42 = scalar_select %p41, 0, %s40
    %s43 = sadd.s32 1, %s34
    %s44 = scalar_select %p41, %s43, %s34
    %p45 = scmp.ge.s32.totalorder %s44, 1
    %s46 = scalar_select %p45, 0, %s44
    %s47 = ssub.s32 %s34, %s46
    %p48 = scmp.eq.s32.totalorder %s47, 0
    %s50 = sadd.s32 %s49, 1
    %s51 = scalar_select %p48, %s49, %s50
    %p54 = pneg %p48
    %p55 = scmp.eq.s32.totalorder %s27, 1
    %p56 = por %p54, %p55
    %p57 = scmp.ne.s32.totalorder %s49, %s52
    %p58 = scmp.eq.s32.totalorder %s27, 0
    %p59 = por %p57, %p58
    %p60 = scmp.ne.s32.totalorder %s49, %s52
    %p61 = scmp.eq.s32.totalorder %s32, 1
    %p62 = por %p60, %p61
    %p63 = scmp.ne.s32.totalorder %s52, %s53
    %p64 = scmp.eq.s32.totalorder %s32, 0
    %p65 = por %p63, %p64
    %p66 = scmp.ne.s32.totalorder %s52, %s53
    %p67 = scmp.eq.s32.totalorder %s33, 1
    %p68 = por %p66, %p67
    %p70 = scmp.ne.s32.totalorder %s53, %s69
    %p71 = scmp.eq.s32.totalorder %s33, 0
    %p72 = por %p70, %p71
    %s73 = ssub.s32 %s34, %s46
    %p74 = scmp.eq.s32.totalorder %s73, 0
    %s76 = sadd.s32 %s75, 1
    %s77 = scalar_select %p74, %s75, %s76
    %p80 = pneg %p74
    %p81 = scmp.eq.s32.totalorder %s27, 1
    %p82 = por %p80, %p81
    %p83 = scmp.ne.s32.totalorder %s75, %s78
    %p84 = scmp.eq.s32.totalorder %s27, 0
    %p85 = por %p83, %p84
    %p86 = scmp.ne.s32.totalorder %s75, %s78
    %p87 = scmp.eq.s32.totalorder %s32, 1
    %p88 = por %p86, %p87
    %p89 = scmp.ne.s32.totalorder %s78, %s79
    %p90 = scmp.eq.s32.totalorder %s32, 0
    %p91 = por %p89, %p90
    %p92 = scmp.ne.s32.totalorder %s78, %s79
    %p93 = scmp.eq.s32.totalorder %s33, 1
    %p94 = por %p92, %p93
    %p96 = scmp.ne.s32.totalorder %s79, %s95
    %p97 = scmp.eq.s32.totalorder %s33, 0
    %p98 = por %p96, %p97
    %s99 = ssub.s32 %s34, %s46
    %p100 = scmp.eq.s32.totalorder %s99, 0
    %s102 = sadd.s32 %s101, 1
    %s103 = scalar_select %p100, %s101, %s102
    %p106 = pneg %p100
    %p107 = scmp.eq.s32.totalorder %s27, 1
    %p108 = por %p106, %p107
    %p109 = scmp.ne.s32.totalorder %s101, %s104
    %p110 = scmp.eq.s32.totalorder %s27, 0
    %p111 = por %p109, %p110
    %p112 = scmp.ne.s32.totalorder %s101, %s104
    %p113 = scmp.eq.s32.totalorder %s32, 1
    %p114 = por %p112, %p113
    %p115 = scmp.ne.s32.totalorder %s104, %s105
    %p116 = scmp.eq.s32.totalorder %s32, 0
    %p117 = por %p115, %p116
    %p118 = scmp.ne.s32.totalorder %s104, %s105
    %p119 = scmp.eq.s32.totalorder %s33, 1
    %p120 = por %p118, %p119
    %p122 = scmp.ne.s32.totalorder %s105, %s121
    %p123 = scmp.eq.s32.totalorder %s33, 0
    %p124 = por %p122, %p123
    %s125 = ssub.s32 %s35, %s42
    %p126 = scmp.eq.s32.totalorder %s125, 0
    %s128 = sadd.s32 %s127, 1
    %s129 = scalar_select %p126, %s127, %s128
    %p132 = pneg %p126
    %p133 = scmp.eq.s32.totalorder %s27, 1
    %p134 = por %p132, %p133
    %p135 = scmp.ne.s32.totalorder %s127, %s130
    %p136 = scmp.eq.s32.totalorder %s27, 0
    %p137 = por %p135, %p136
    %p138 = scmp.ne.s32.totalorder %s127, %s130
    %p139 = scmp.eq.s32.totalorder %s32, 1
    %p140 = por %p138, %p139
    %p141 = scmp.ne.s32.totalorder %s130, %s131
    %p142 = scmp.eq.s32.totalorder %s32, 0
    %p143 = por %p141, %p142
    %p144 = scmp.ne.s32.totalorder %s130, %s131
    %p145 = scmp.eq.s32.totalorder %s33, 1
    %p146 = por %p144, %p145
    %p148 = scmp.ne.s32.totalorder %s131, %s147
    %p149 = scmp.eq.s32.totalorder %s33, 0
    %p150 = por %p148, %p149
    %s151 = ssub.s32 %s35, %s42
    %p152 = scmp.eq.s32.totalorder %s151, 0
    %s154 = sadd.s32 %s153, 1
    %s155 = scalar_select %p152, %s153, %s154
    %p158 = pneg %p152
    %p159 = scmp.eq.s32.totalorder %s27, 1
    %p160 = por %p158, %p159
    %p161 = scmp.ne.s32.totalorder %s153, %s156
    %p162 = scmp.eq.s32.totalorder %s27, 0
    %p163 = por %p161, %p162
    %p164 = scmp.ne.s32.totalorder %s153, %s156
    %p165 = scmp.eq.s32.totalorder %s32, 1
    %p166 = por %p164, %p165
    %p167 = scmp.ne.s32.totalorder %s156, %s157
    %p168 = scmp.eq.s32.totalorder %s32, 0
    %p169 = por %p167, %p168
    %p170 = scmp.ne.s32.totalorder %s156, %s157
    %p171 = scmp.eq.s32.totalorder %s33, 1
    %p172 = por %p170, %p171
    %p174 = scmp.ne.s32.totalorder %s157, %s173
    %p175 = scmp.eq.s32.totalorder %s33, 0
    %p176 = por %p174, %p175
    %s177 = ssub.s32 %s35, %s42
    %p178 = scmp.eq.s32.totalorder %s177, 0
    %s180 = sadd.s32 %s179, 1
    %s181 = scalar_select %p178, %s179, %s180
    %p184 = pneg %p178
    %p185 = scmp.eq.s32.totalorder %s27, 1
    %p186 = por %p184, %p185
    %p187 = scmp.ne.s32.totalorder %s179, %s182
    %p188 = scmp.eq.s32.totalorder %s27, 0
    %p189 = por %p187, %p188
    %p190 = scmp.ne.s32.totalorder %s179, %s182
    %p191 = scmp.eq.s32.totalorder %s32, 1
    %p192 = por %p190, %p191
    %p193 = scmp.ne.s32.totalorder %s182, %s183
    %p194 = scmp.eq.s32.totalorder %s32, 0
    %p195 = por %p193, %p194
    %p196 = scmp.ne.s32.totalorder %s182, %s183
    %p197 = scmp.eq.s32.totalorder %s33, 1
    %p198 = por %p196, %p197
    %p200 = scmp.ne.s32.totalorder %s183, %s199
    %p201 = scmp.eq.s32.totalorder %s33, 0
    %p202 = por %p200, %p201
    %s203 = ssub.s32 %s35, %s42
    %p204 = scmp.eq.s32.totalorder %s203, 0
    %s206 = sadd.s32 %s205, 1
    %s207 = scalar_select %p204, %s205, %s206
    %p210 = pneg %p204
    %p211 = scmp.eq.s32.totalorder %s27, 1
    %p212 = por %p210, %p211
    %p213 = scmp.ne.s32.totalorder %s205, %s208
    %p214 = scmp.eq.s32.totalorder %s27, 0
    %p215 = por %p213, %p214
    %p216 = scmp.ne.s32.totalorder %s205, %s208
    %p217 = scmp.eq.s32.totalorder %s32, 1
    %p218 = por %p216, %p217
    %p219 = scmp.ne.s32.totalorder %s208, %s209
    %p220 = scmp.eq.s32.totalorder %s32, 0
    %p221 = por %p219, %p220
    %p222 = scmp.ne.s32.totalorder %s208, %s209
    %p223 = scmp.eq.s32.totalorder %s33, 1
    %p224 = por %p222, %p223
    %p226 = scmp.ne.s32.totalorder %s209, %s225
    %p227 = scmp.eq.s32.totalorder %s33, 0
    %p228 = por %p226, %p227
    %s229 = ssub.s32 %s35, %s42
    %p230 = scmp.eq.s32.totalorder %s229, 0
    %s232 = sadd.s32 %s231, 1
    %s233 = scalar_select %p230, %s231, %s232
    %p236 = pneg %p230
    %p237 = scmp.eq.s32.totalorder %s27, 1
    %p238 = por %p236, %p237
    %p239 = scmp.ne.s32.totalorder %s231, %s234
    %p240 = scmp.eq.s32.totalorder %s27, 0
    %p241 = por %p239, %p240
    %p242 = scmp.ne.s32.totalorder %s231, %s234
    %p243 = scmp.eq.s32.totalorder %s32, 1
    %p244 = por %p242, %p243
    %p245 = scmp.ne.s32.totalorder %s234, %s235
    %p246 = scmp.eq.s32.totalorder %s32, 0
    %p247 = por %p245, %p246
    %p248 = scmp.ne.s32.totalorder %s234, %s235
    %p249 = scmp.eq.s32.totalorder %s33, 1
    %p250 = por %p248, %p249
    %p252 = scmp.ne.s32.totalorder %s235, %s251
    %p253 = scmp.eq.s32.totalorder %s33, 0
    %p254 = por %p252, %p253
    %s255 = ssub.s32 %s35, %s42
    %p256 = scmp.eq.s32.totalorder %s255, 0
    %s258 = sadd.s32 %s257, 1
    %s259 = scalar_select %p256, %s257, %s258
    %p262 = pneg %p256
    %p263 = scmp.eq.s32.totalorder %s27, 1
    %p264 = por %p262, %p263
    %p265 = scmp.ne.s32.totalorder %s257, %s260
    %p266 = scmp.eq.s32.totalorder %s27, 0
    %p267 = por %p265, %p266
    %p268 = scmp.ne.s32.totalorder %s257, %s260
    %p269 = scmp.eq.s32.totalorder %s32, 1
    %p270 = por %p268, %p269
    %p271 = scmp.ne.s32.totalorder %s260, %s261
    %p272 = scmp.eq.s32.totalorder %s32, 0
    %p273 = por %p271, %p272
    %p274 = scmp.ne.s32.totalorder %s260, %s261
    %p275 = scmp.eq.s32.totalorder %s33, 1
    %p276 = por %p274, %p275
    %p278 = scmp.ne.s32.totalorder %s261, %s277
    %p279 = scmp.eq.s32.totalorder %s33, 0
    %p280 = por %p278, %p279
    %s281 = ssub.s32 %s35, %s42
    %p282 = scmp.eq.s32.totalorder %s281, 0
    %s284 = sadd.s32 %s283, 1
    %s285 = scalar_select %p282, %s283, %s284
    %p288 = pneg %p282
    %p289 = scmp.eq.s32.totalorder %s27, 1
    %p290 = por %p288, %p289
    %p291 = scmp.ne.s32.totalorder %s283, %s286
    %p292 = scmp.eq.s32.totalorder %s27, 0
    %p293 = por %p291, %p292
    %p294 = scmp.ne.s32.totalorder %s283, %s286
    %p295 = scmp.eq.s32.totalorder %s32, 1
    %p296 = por %p294, %p295
    %p297 = scmp.ne.s32.totalorder %s286, %s287
    %p298 = scmp.eq.s32.totalorder %s32, 0
    %p299 = por %p297, %p298
    %p300 = scmp.ne.s32.totalorder %s286, %s287
    %p301 = scmp.eq.s32.totalorder %s33, 1
    %p302 = por %p300, %p301
    %p304 = scmp.ne.s32.totalorder %s287, %s303
    %p305 = scmp.eq.s32.totalorder %s33, 0
    %p306 = por %p304, %p305
    %s307 = ssub.s32 %s35, %s42
    %p308 = scmp.eq.s32.totalorder %s307, 0
    %s310 = sadd.s32 %s309, 1
    %s311 = scalar_select %p308, %s309, %s310
    %p314 = pneg %p308
    %p315 = scmp.eq.s32.totalorder %s27, 1
    %p316 = por %p314, %p315
    %p317 = scmp.ne.s32.totalorder %s309, %s312
    %p318 = scmp.eq.s32.totalorder %s27, 0
    %p319 = por %p317, %p318
    %p320 = scmp.ne.s32.totalorder %s309, %s312
    %p321 = scmp.eq.s32.totalorder %s32, 1
    %p322 = por %p320, %p321
    %p323 = scmp.ne.s32.totalorder %s312, %s313
    %p324 = scmp.eq.s32.totalorder %s32, 0
    %p325 = por %p323, %p324
    %p326 = scmp.ne.s32.totalorder %s312, %s313
    %p327 = scmp.eq.s32.totalorder %s33, 1
    %p328 = por %p326, %p327
    %p330 = scmp.ne.s32.totalorder %s313, %s329
    %p331 = scmp.eq.s32.totalorder %s33, 0
    %p332 = por %p330, %p331
    %s333 = ssub.s32 %s35, %s42
    %p334 = scmp.eq.s32.totalorder %s333, 0
    %s336 = sadd.s32 %s335, 1
    %s337 = scalar_select %p334, %s335, %s336
    %p340 = pneg %p334
    %p341 = scmp.eq.s32.totalorder %s27, 1
    %p342 = por %p340, %p341
    %p343 = scmp.ne.s32.totalorder %s335, %s338
    %p344 = scmp.eq.s32.totalorder %s27, 0
    %p345 = por %p343, %p344
    %p346 = scmp.ne.s32.totalorder %s335, %s338
    %p347 = scmp.eq.s32.totalorder %s32, 1
    %p348 = por %p346, %p347
    %p349 = scmp.ne.s32.totalorder %s338, %s339
    %p350 = scmp.eq.s32.totalorder %s32, 0
    %p351 = por %p349, %p350
    %p352 = scmp.ne.s32.totalorder %s338, %s339
    %p353 = scmp.eq.s32.totalorder %s33, 1
    %p354 = por %p352, %p353
    %p356 = scmp.ne.s32.totalorder %s339, %s355
    %p357 = scmp.eq.s32.totalorder %s33, 0
    %p358 = por %p356, %p357
    %s359 = ssub.s32 %s35, %s42
    %p360 = scmp.eq.s32.totalorder %s359, 0
    %s362 = sadd.s32 %s361, 1
    %s363 = scalar_select %p360, %s361, %s362
    %p366 = pneg %p360
    %p367 = scmp.eq.s32.totalorder %s27, 1
    %p368 = por %p366, %p367
    %p369 = scmp.ne.s32.totalorder %s361, %s364
    %p370 = scmp.eq.s32.totalorder %s27, 0
    %p371 = por %p369, %p370
    %p372 = scmp.ne.s32.totalorder %s361, %s364
    %p373 = scmp.eq.s32.totalorder %s32, 1
    %p374 = por %p372, %p373
    %p375 = scmp.ne.s32.totalorder %s364, %s365
    %p376 = scmp.eq.s32.totalorder %s32, 0
    %p377 = por %p375, %p376
    %p378 = scmp.ne.s32.totalorder %s364, %s365
    %p379 = scmp.eq.s32.totalorder %s33, 1
    %p380 = por %p378, %p379
    %p382 = scmp.ne.s32.totalorder %s365, %s381
    %p383 = scmp.eq.s32.totalorder %s33, 0
    %p384 = por %p382, %p383
    %s385 = ssub.s32 %s35, %s42
    %p386 = scmp.eq.s32.totalorder %s385, 0
    %s388 = sadd.s32 %s387, 1
    %s389 = scalar_select %p386, %s387, %s388
    %p392 = pneg %p386
    %p393 = scmp.eq.s32.totalorder %s27, 1
    %p394 = por %p392, %p393
    %p395 = scmp.ne.s32.totalorder %s387, %s390
    %p396 = scmp.eq.s32.totalorder %s27, 0
    %p397 = por %p395, %p396
    %p398 = scmp.ne.s32.totalorder %s387, %s390
    %p399 = scmp.eq.s32.totalorder %s32, 1
    %p400 = por %p398, %p399
    %p401 = scmp.ne.s32.totalorder %s390, %s391
    %p402 = scmp.eq.s32.totalorder %s32, 0
    %p403 = por %p401, %p402
    %p404 = scmp.ne.s32.totalorder %s390, %s391
    %p405 = scmp.eq.s32.totalorder %s33, 1
    %p406 = por %p404, %p405
    %p408 = scmp.ne.s32.totalorder %s391, %s407
    %p409 = scmp.eq.s32.totalorder %s33, 0
    %p410 = por %p408, %p409
    %s411 = ssub.s32 %s35, %s42
    %p412 = scmp.eq.s32.totalorder %s411, 0
    %s414 = sadd.s32 %s413, 1
    %s415 = scalar_select %p412, %s413, %s414
    %p418 = pneg %p412
    %p419 = scmp.eq.s32.totalorder %s27, 1
    %p420 = por %p418, %p419
    %p421 = scmp.ne.s32.totalorder %s413, %s416
    %p422 = scmp.eq.s32.totalorder %s27, 0
    %p423 = por %p421, %p422
    %p424 = scmp.ne.s32.totalorder %s413, %s416
    %p425 = scmp.eq.s32.totalorder %s32, 1
    %p426 = por %p424, %p425
    %p427 = scmp.ne.s32.totalorder %s416, %s417
    %p428 = scmp.eq.s32.totalorder %s32, 0
    %p429 = por %p427, %p428
    %p430 = scmp.ne.s32.totalorder %s416, %s417
    %p431 = scmp.eq.s32.totalorder %s33, 1
    %p432 = por %p430, %p431
    %p434 = scmp.ne.s32.totalorder %s417, %s433
    %p435 = scmp.eq.s32.totalorder %s33, 0
    %p436 = por %p434, %p435
    %s437 = ssub.s32 %s35, %s42
    %p438 = scmp.eq.s32.totalorder %s437, 0
    %s440 = sadd.s32 %s439, 1
    %s441 = scalar_select %p438, %s439, %s440
    %p444 = pneg %p438
    %p445 = scmp.eq.s32.totalorder %s27, 1
    %p446 = por %p444, %p445
    %p447 = scmp.ne.s32.totalorder %s439, %s442
    %p448 = scmp.eq.s32.totalorder %s27, 0
    %p449 = por %p447, %p448
    %p450 = scmp.ne.s32.totalorder %s439, %s442
    %p451 = scmp.eq.s32.totalorder %s32, 1
    %p452 = por %p450, %p451
    %p453 = scmp.ne.s32.totalorder %s442, %s443
    %p454 = scmp.eq.s32.totalorder %s32, 0
    %p455 = por %p453, %p454
    %p456 = scmp.ne.s32.totalorder %s442, %s443
    %p457 = scmp.eq.s32.totalorder %s33, 1
    %p458 = por %p456, %p457
    %p460 = scmp.ne.s32.totalorder %s443, %s459
    %p461 = scmp.eq.s32.totalorder %s33, 0
    %p462 = por %p460, %p461
    %s463 = ssub.s32 %s35, %s42
    %p464 = scmp.eq.s32.totalorder %s463, 0
    %s466 = sadd.s32 %s465, 1
    %s467 = scalar_select %p464, %s465, %s466
    %p470 = pneg %p464
    %p471 = scmp.eq.s32.totalorder %s27, 1
    %p472 = por %p470, %p471
    %p473 = scmp.ne.s32.totalorder %s465, %s468
    %p474 = scmp.eq.s32.totalorder %s27, 0
    %p475 = por %p473, %p474
    %p476 = scmp.ne.s32.totalorder %s465, %s468
    %p477 = scmp.eq.s32.totalorder %s32, 1
    %p478 = por %p476, %p477
    %p479 = scmp.ne.s32.totalorder %s468, %s469
    %p480 = scmp.eq.s32.totalorder %s32, 0
    %p481 = por %p479, %p480
    %p482 = scmp.ne.s32.totalorder %s468, %s469
    %p483 = scmp.eq.s32.totalorder %s33, 1
    %p484 = por %p482, %p483
    %p486 = scmp.ne.s32.totalorder %s469, %s485
    %p487 = scmp.eq.s32.totalorder %s33, 0
    %p488 = por %p486, %p487
    %s489 = ssub.s32 %s35, %s42
    %p490 = scmp.eq.s32.totalorder %s489, 0
    %s492 = sadd.s32 %s491, 1
    %s493 = scalar_select %p490, %s491, %s492
    %p496 = pneg %p490
    %p497 = scmp.eq.s32.totalorder %s27, 1
    %p498 = por %p496, %p497
    %p499 = scmp.ne.s32.totalorder %s491, %s494
    %p500 = scmp.eq.s32.totalorder %s27, 0
    %p501 = por %p499, %p500
    %p502 = scmp.ne.s32.totalorder %s491, %s494
    %p503 = scmp.eq.s32.totalorder %s32, 1
    %p504 = por %p502, %p503
    %p505 = scmp.ne.s32.totalorder %s494, %s495
    %p506 = scmp.eq.s32.totalorder %s32, 0
    %p507 = por %p505, %p506
    %p508 = scmp.ne.s32.totalorder %s494, %s495
    %p509 = scmp.eq.s32.totalorder %s33, 1
    %p510 = por %p508, %p509
    %p512 = scmp.ne.s32.totalorder %s495, %s511
    %p513 = scmp.eq.s32.totalorder %s33, 0
    %p514 = por %p512, %p513
    %s515 = ssub.s32 %s35, %s42
    %p516 = scmp.eq.s32.totalorder %s515, 0
    %s518 = sadd.s32 %s517, 1
    %s519 = scalar_select %p516, %s517, %s518
    %p522 = pneg %p516
    %p523 = scmp.eq.s32.totalorder %s27, 1
    %p524 = por %p522, %p523
    %p525 = scmp.ne.s32.totalorder %s517, %s520
    %p526 = scmp.eq.s32.totalorder %s27, 0
    %p527 = por %p525, %p526
    %p528 = scmp.ne.s32.totalorder %s517, %s520
    %p529 = scmp.eq.s32.totalorder %s32, 1
    %p530 = por %p528, %p529
    %p531 = scmp.ne.s32.totalorder %s520, %s521
    %p532 = scmp.eq.s32.totalorder %s32, 0
    %p533 = por %p531, %p532
    %p534 = scmp.ne.s32.totalorder %s520, %s521
    %p535 = scmp.eq.s32.totalorder %s33, 1
    %p536 = por %p534, %p535
    %p538 = scmp.ne.s32.totalorder %s521, %s537
    %p539 = scmp.eq.s32.totalorder %s33, 0
    %p540 = por %p538, %p539
    %s542 = sadd.s32 %s541, 1
    %p545 = scmp.eq.s32.totalorder %s27, 1
    %p546 = scmp.ne.s32.totalorder %s541, %s543
    %p547 = scmp.eq.s32.totalorder %s27, 0
    %p548 = por %p546, %p547
    %p549 = scmp.ne.s32.totalorder %s541, %s543
    %p550 = scmp.eq.s32.totalorder %s32, 1
    %p551 = por %p549, %p550
    %p552 = scmp.ne.s32.totalorder %s543, %s544
    %p553 = scmp.eq.s32.totalorder %s32, 0
    %p554 = por %p552, %p553
    %p555 = scmp.ne.s32.totalorder %s543, %s544
    %p556 = scmp.eq.s32.totalorder %s33, 1
    %p557 = por %p555, %p556
    %p559 = scmp.ne.s32.totalorder %s544, %s558
    %p560 = scmp.eq.s32.totalorder %s33, 0
    %p561 = por %p559, %p560
    %s563 = sadd.s32 %s562, 1
    %p566 = scmp.eq.s32.totalorder %s27, 1
    %p567 = scmp.ne.s32.totalorder %s562, %s564
    %p568 = scmp.eq.s32.totalorder %s27, 0
    %p569 = por %p567, %p568
    %p570 = scmp.ne.s32.totalorder %s562, %s564
    %p571 = scmp.eq.s32.totalorder %s32, 1
    %p572 = por %p570, %p571
    %p573 = scmp.ne.s32.totalorder %s564, %s565
    %p574 = scmp.eq.s32.totalorder %s32, 0
    %p575 = por %p573, %p574
    %p576 = scmp.ne.s32.totalorder %s564, %s565
    %p577 = scmp.eq.s32.totalorder %s33, 1
    %p578 = por %p576, %p577
    %p580 = scmp.ne.s32.totalorder %s565, %s579
    %p581 = scmp.eq.s32.totalorder %s33, 0
    %p582 = por %p580, %p581
    %s583 = ssub.s32 %s34, %s46
    %p584 = scmp.eq.s32.totalorder %s583, 0
    %s586 = sadd.s32 %s585, 1
    %s587 = scalar_select %p584, %s585, %s586
    %p590 = pneg %p584
    %p591 = scmp.eq.s32.totalorder %s27, 1
    %p592 = por %p590, %p591
    %p593 = scmp.ne.s32.totalorder %s585, %s588
    %p594 = scmp.eq.s32.totalorder %s27, 0
    %p595 = por %p593, %p594
    %p596 = scmp.ne.s32.totalorder %s585, %s588
    %p597 = scmp.eq.s32.totalorder %s32, 1
    %p598 = por %p596, %p597
    %p599 = scmp.ne.s32.totalorder %s588, %s589
    %p600 = scmp.eq.s32.totalorder %s32, 0
    %p601 = por %p599, %p600
    %p602 = scmp.ne.s32.totalorder %s588, %s589
    %p603 = scmp.eq.s32.totalorder %s33, 1
    %p604 = por %p602, %p603
    %p606 = scmp.ne.s32.totalorder %s589, %s605
    %p607 = scmp.eq.s32.totalorder %s33, 0
    %p608 = por %p606, %p607
    %p609 = scmp.le.s32.totalorder 1, %s27
    %p610 = scmp.lt.s32.totalorder %s27, 3
    %p611 = pnand %p609, %p610
    %p612 = pneg %p611
    // Predicated region
    $region9: #{bert4rec_forward.1} parent=5 // pred_check
      _
    $region10: #{bert4rec_forward.1} parent=5 // pred_check_branch
      %614 = sbr.rel (%p611) target = $region12
    $region11: #{bert4rec_forward.1} parent=5 // pred_region
      %s615 = ssub.s32 %s27, 1
      // Predicated region
      $region13: #{bert4rec_forward.1} parent=11 // pred_check
        %p616 = pneg %p65
      $region14: #{bert4rec_forward.1} parent=11 // pred_check_branch
        %618 = sbr.rel (%p616) target = $region16
      $region15: #{bert4rec_forward.1} parent=11 // pred_region
        %s619 = smul.u32 2, %s36
        %p620 = scmp.lt.s32.totalorder %s619, 1
        %s621 = scalar_select %p620, %s619, 1
        %s622 = smul.addr %s621, 8
        %s623 = scalar_lea.vmem %s0, %s622
        %s624 = smul.u32 2, %s36
      $region16: #{bert4rec_forward.1} parent=11 // pred_fallthru
        _
      // Predicated region
      $region17: #{bert4rec_forward.1} parent=11 // pred_check
        %p625 = pneg %p91
      $region18: #{bert4rec_forward.1} parent=11 // pred_check_branch
        %627 = sbr.rel (%p625) target = $region20
      $region19: #{bert4rec_forward.1} parent=11 // pred_region
        %s628 = smul.u32 2, %s36
        %p629 = scmp.lt.s32.totalorder %s628, 1
        %s630 = scalar_select %p629, %s628, 1
        %s631 = smul.addr %s630, 8
        %s632 = scalar_lea.vmem %s1, %s631
        %s633 = smul.u32 2, %s36
      $region20: #{bert4rec_forward.1} parent=11 // pred_fallthru
        _
      // Predicated region
      $region21: #{bert4rec_forward.1} parent=11 // pred_check
        %p634 = pneg %p117
      $region22: #{bert4rec_forward.1} parent=11 // pred_check_branch
        %636 = sbr.rel (%p634) target = $region24
      $region23: #{bert4rec_forward.1} parent=11 // pred_region
        %s637 = smul.u32 2, %s36
        %p638 = scmp.lt.s32.totalorder %s637, 1
        %s639 = scalar_select %p638, %s637, 1
        %s640 = smul.addr %s639, 8
        %s641 = scalar_lea.vmem %s2, %s640
        %s642 = smul.u32 2, %s36
      $region24: #{bert4rec_forward.1} parent=11 // pred_fallthru
        _
      // Predicated region
      $region25: #{bert4rec_forward.1} parent=11 // pred_check
        %p643 = pneg %p554
      $region26: #{bert4rec_forward.1} parent=11 // pred_check_branch
        %645 = sbr.rel (%p643) target = $region28
      $region27: #{bert4rec_forward.1} parent=11 // pred_region
        _
      $region28: #{bert4rec_forward.1} parent=11 // pred_fallthru
        _
      // Predicated region
      $region29: #{bert4rec_forward.1} parent=11 // pred_check
        %p646 = pneg %p575
      $region30: #{bert4rec_forward.1} parent=11 // pred_check_branch
        %648 = sbr.rel (%p646) target = $region32
      $region31: #{bert4rec_forward.1} parent=11 // pred_region
        _
      $region32: #{bert4rec_forward.1} parent=11 // pred_fallthru
        _
    $region12: #{bert4rec_forward.1} parent=5 // pred_fallthru
      _
    %p649 = scmp.lt.s32.totalorder %s27, 2
    // Predicated region
    $region33: #{bert4rec_forward.1} parent=5 // pred_check
      %p650 = pneg %p649
    $region34: #{bert4rec_forward.1} parent=5 // pred_check_branch
      %652 = sbr.rel (%p650) target = $region36
    $region35: #{bert4rec_forward.1} parent=5 // pred_region
      // Predicated region
      $region37: #{bert4rec_forward.1} parent=35 // pred_check
        %p653 = pneg %p137
      $region38: #{bert4rec_forward.1} parent=35 // pred_check_branch
        %655 = sbr.rel (%p653) target = $region40
      $region39: #{bert4rec_forward.1} parent=35 // pred_region
        %p656 = scmp.lt.s32.totalorder %s35, 1
        %s657 = scalar_select %p656, %s35, 1
        %s658 = scalar_lea.vmem %s3, %s657
      $region40: #{bert4rec_forward.1} parent=35 // pred_fallthru
        _
      // Predicated region
      $region41: #{bert4rec_forward.1} parent=35 // pred_check
        %p659 = pneg %p163
      $region42: #{bert4rec_forward.1} parent=35 // pred_check_branch
        %661 = sbr.rel (%p659) target = $region44
      $region43: #{bert4rec_forward.1} parent=35 // pred_region
        %p662 = scmp.lt.s32.totalorder %s35, 1
        %s663 = scalar_select %p662, %s35, 1
        %s664 = scalar_lea.vmem %s4, %s663
      $region44: #{bert4rec_forward.1} parent=35 // pred_fallthru
        _
      // Predicated region
      $region45: #{bert4rec_forward.1} parent=35 // pred_check
        %p665 = pneg %p189
      $region46: #{bert4rec_forward.1} parent=35 // pred_check_branch
        %667 = sbr.rel (%p665) target = $region48
      $region47: #{bert4rec_forward.1} parent=35 // pred_region
        %p668 = scmp.lt.s32.totalorder %s35, 1
        %s669 = scalar_select %p668, %s35, 1
        %s670 = smul.addr %s669, 4
        %s671 = smul.addr %s670, 4
        %s672 = scalar_lea.vmem %s5, %s671
      $region48: #{bert4rec_forward.1} parent=35 // pred_fallthru
        _
      // Predicated region
      $region49: #{bert4rec_forward.1} parent=35 // pred_check
        %p673 = pneg %p215
      $region50: #{bert4rec_forward.1} parent=35 // pred_check_branch
        %675 = sbr.rel (%p673) target = $region52
      $region51: #{bert4rec_forward.1} parent=35 // pred_region
        %p676 = scmp.lt.s32.totalorder %s35, 1
        %s677 = scalar_select %p676, %s35, 1
        %s678 = smul.addr %s677, 4
        %s679 = smul.addr %s678, 4
        %s680 = scalar_lea.vmem %s6, %s679
      $region52: #{bert4rec_forward.1} parent=35 // pred_fallthru
        _
      // Predicated region
      $region53: #{bert4rec_forward.1} parent=35 // pred_check
        %p681 = pneg %p241
      $region54: #{bert4rec_forward.1} parent=35 // pred_check_branch
        %683 = sbr.rel (%p681) target = $region56
      $region55: #{bert4rec_forward.1} parent=35 // pred_region
        %p684 = scmp.lt.s32.totalorder %s35, 1
        %s685 = scalar_select %p684, %s35, 1
        %s686 = smul.addr %s685, 4
        %s687 = smul.addr %s686, 4
        %s688 = scalar_lea.vmem %s7, %s687
      $region56: #{bert4rec_forward.1} parent=35 // pred_fallthru
        _
      // Predicated region
      $region57: #{bert4rec_forward.1} parent=35 // pred_check
        %p689 = pneg %p267
      $region58: #{bert4rec_forward.1} parent=35 // pred_check_branch
        %691 = sbr.rel (%p689) target = $region60
      $region59: #{bert4rec_forward.1} parent=35 // pred_region
        %p692 = scmp.lt.s32.totalorder %s35, 1
        %s693 = scalar_select %p692, %s35, 1
        %s694 = scalar_lea.vmem %s8, %s693
      $region60: #{bert4rec_forward.1} parent=35 // pred_fallthru
        _
      // Predicated region
      $region61: #{bert4rec_forward.1} parent=35 // pred_check
        %p695 = pneg %p293
      $region62: #{bert4rec_forward.1} parent=35 // pred_check_branch
        %697 = sbr.rel (%p695) target = $region64
      $region63: #{bert4rec_forward.1} parent=35 // pred_region
        %p698 = scmp.lt.s32.totalorder %s35, 1
        %s699 = scalar_select %p698, %s35, 1
        %s700 = scalar_lea.vmem %s9, %s699
      $region64: #{bert4rec_forward.1} parent=35 // pred_fallthru
        _
      // Predicated region
      $region65: #{bert4rec_forward.1} parent=35 // pred_check
        %p701 = pneg %p319
      $region66: #{bert4rec_forward.1} parent=35 // pred_check_branch
        %703 = sbr.rel (%p701) target = $region68
      $region67: #{bert4rec_forward.1} parent=35 // pred_region
        %p704 = scmp.lt.s32.totalorder %s35, 1
        %s705 = scalar_select %p704, %s35, 1
        %s706 = scalar_lea.vmem %s10, %s705
      $region68: #{bert4rec_forward.1} parent=35 // pred_fallthru
        _
      // Predicated region
      $region69: #{bert4rec_forward.1} parent=35 // pred_check
        %p707 = pneg %p345
      $region70: #{bert4rec_forward.1} parent=35 // pred_check_branch
        %709 = sbr.rel (%p707) target = $region72
      $region71: #{bert4rec_forward.1} parent=35 // pred_region
        %p710 = scmp.lt.s32.totalorder %s35, 1
        %s711 = scalar_select %p710, %s35, 1
        %s712 = smul.addr %s711, 4
        %s713 = smul.addr %s712, 4
        %s714 = scalar_lea.vmem %s11, %s713
      $region72: #{bert4rec_forward.1} parent=35 // pred_fallthru
        _
      // Predicated region
      $region73: #{bert4rec_forward.1} parent=35 // pred_check
        %p715 = pneg %p371
      $region74: #{bert4rec_forward.1} parent=35 // pred_check_branch
        %717 = sbr.rel (%p715) target = $region76
      $region75: #{bert4rec_forward.1} parent=35 // pred_region
        %p718 = scmp.lt.s32.totalorder %s35, 1
        %s719 = scalar_select %p718, %s35, 1
        %s720 = scalar_lea.vmem %s12, %s719
      $region76: #{bert4rec_forward.1} parent=35 // pred_fallthru
        _
      // Predicated region
      $region77: #{bert4rec_forward.1} parent=35 // pred_check
        %p721 = pneg %p397
      $region78: #{bert4rec_forward.1} parent=35 // pred_check_branch
        %723 = sbr.rel (%p721) target = $region80
      $region79: #{bert4rec_forward.1} parent=35 // pred_region
        %p724 = scmp.lt.s32.totalorder %s35, 1
        %s725 = scalar_select %p724, %s35, 1
        %s726 = scalar_lea.vmem %s13, %s725
      $region80: #{bert4rec_forward.1} parent=35 // pred_fallthru
        _
      // Predicated region
      $region81: #{bert4rec_forward.1} parent=35 // pred_check
        %p727 = pneg %p423
      $region82: #{bert4rec_forward.1} parent=35 // pred_check_branch
        %729 = sbr.rel (%p727) target = $region84
      $region83: #{bert4rec_forward.1} parent=35 // pred_region
        %p730 = scmp.lt.s32.totalorder %s35, 1
        %s731 = scalar_select %p730, %s35, 1
        %s732 = scalar_lea.vmem %s14, %s731
      $region84: #{bert4rec_forward.1} parent=35 // pred_fallthru
        _
      // Predicated region
      $region85: #{bert4rec_forward.1} parent=35 // pred_check
        %p733 = pneg %p449
      $region86: #{bert4rec_forward.1} parent=35 // pred_check_branch
        %735 = sbr.rel (%p733) target = $region88
      $region87: #{bert4rec_forward.1} parent=35 // pred_region
        %p736 = scmp.lt.s32.totalorder %s35, 1
        %s737 = scalar_select %p736, %s35, 1
        %s738 = smul.addr %s737, 4
        %s739 = smul.addr %s738, 4
        %s740 = scalar_lea.vmem %s15, %s739
      $region88: #{bert4rec_forward.1} parent=35 // pred_fallthru
        _
      // Predicated region
      $region89: #{bert4rec_forward.1} parent=35 // pred_check
        %p741 = pneg %p475
      $region90: #{bert4rec_forward.1} parent=35 // pred_check_branch
        %743 = sbr.rel (%p741) target = $region92
      $region91: #{bert4rec_forward.1} parent=35 // pred_region
        %p744 = scmp.lt.s32.totalorder %s35, 1
        %s745 = scalar_select %p744, %s35, 1
        %s746 = scalar_lea.vmem %s16, %s745
      $region92: #{bert4rec_forward.1} parent=35 // pred_fallthru
        _
      // Predicated region
      $region93: #{bert4rec_forward.1} parent=35 // pred_check
        %p747 = pneg %p501
      $region94: #{bert4rec_forward.1} parent=35 // pred_check_branch
        %749 = sbr.rel (%p747) target = $region96
      $region95: #{bert4rec_forward.1} parent=35 // pred_region
        %p750 = scmp.lt.s32.totalorder %s35, 1
        %s751 = scalar_select %p750, %s35, 1
        %s752 = smul.addr %s751, 4
        %s753 = smul.addr %s752, 4
        %s754 = scalar_lea.vmem %s17, %s753
      $region96: #{bert4rec_forward.1} parent=35 // pred_fallthru
        _
      // Predicated region
      $region97: #{bert4rec_forward.1} parent=35 // pred_check
        %p755 = pneg %p527
      $region98: #{bert4rec_forward.1} parent=35 // pred_check_branch
        %757 = sbr.rel (%p755) target = $region100
      $region99: #{bert4rec_forward.1} parent=35 // pred_region
        %p758 = scmp.lt.s32.totalorder %s35, 1
        %s759 = scalar_select %p758, %s35, 1
        %s760 = scalar_lea.vmem %s18, %s759
      $region100: #{bert4rec_forward.1} parent=35 // pred_fallthru
        _
    $region36: #{bert4rec_forward.1} parent=5 // pred_fallthru
      _
    %p761 = scmp.le.s32.totalorder 1, %s27
    %p762 = scmp.lt.s32.totalorder %s27, 3
    %p763 = pnand %p761, %p762
    %p764 = pneg %p763
    // Predicated region
    $region101: #{bert4rec_forward.1} parent=5 // pred_check
      _
    $region102: #{bert4rec_forward.1} parent=5 // pred_check_branch
      %766 = sbr.rel (%p763) target = $region104
    $region103: #{bert4rec_forward.1} parent=5 // pred_region
      %s767 = ssub.s32 %s27, 1
      %s768 = smul.u32 2, %s36
      %p769 = scmp.lt.s32.totalorder %s768, 1
      %s770 = scalar_select %p769, %s768, 1
      %s771 = smul.addr %s770, 8
      %s772 = scalar_lea.vmem %s0, %s771
      %p773 = pneg %p65
      %p774 = pneg %p62
      %s775 = smul.u32 2, %s36
      %p776 = scmp.lt.s32.totalorder %s775, 1
      %s777 = scalar_select %p776, %s775, 1
      %s778 = smul.addr %s777, 8
      %s779 = scalar_lea.vmem %s1, %s778
      %p780 = pneg %p91
      %p781 = pneg %p88
      %s782 = smul.u32 2, %s36
      %p783 = scmp.lt.s32.totalorder %s782, 1
      %s784 = scalar_select %p783, %s782, 1
      %s785 = smul.addr %s784, 8
      %s786 = scalar_lea.vmem %s2, %s785
      %p787 = pneg %p117
      %p788 = pneg %p114
      %p789 = scmp.lt.s32.totalorder %s37, 1
      %s790 = scalar_select %p789, %s37, 1
      %s791 = scalar_lea.vmem %s3, %s790
      %p792 = pneg %p143
      %p793 = pneg %p140
      %p794 = scmp.lt.s32.totalorder %s37, 1
      %s795 = scalar_select %p794, %s37, 1
      %s796 = scalar_lea.vmem %s4, %s795
      %p797 = pneg %p169
      %p798 = pneg %p166
      %p799 = scmp.lt.s32.totalorder %s37, 1
      %s800 = scalar_select %p799, %s37, 1
      %s801 = smul.addr %s800, 4
      %s802 = smul.addr %s801, 4
      %s803 = scalar_lea.vmem %s5, %s802
      %p804 = pneg %p195
      %p805 = pneg %p192
      %p806 = scmp.lt.s32.totalorder %s37, 1
      %s807 = scalar_select %p806, %s37, 1
      %s808 = smul.addr %s807, 4
      %s809 = smul.addr %s808, 4
      %s810 = scalar_lea.vmem %s6, %s809
      %p811 = pneg %p221
      %p812 = pneg %p218
      %p813 = scmp.lt.s32.totalorder %s37, 1
      %s814 = scalar_select %p813, %s37, 1
      %s815 = smul.addr %s814, 4
      %s816 = smul.addr %s815, 4
      %s817 = scalar_lea.vmem %s7, %s816
      %p818 = pneg %p247
      %p819 = pneg %p244
      %p820 = scmp.lt.s32.totalorder %s37, 1
      %s821 = scalar_select %p820, %s37, 1
      %s822 = scalar_lea.vmem %s8, %s821
      %p823 = pneg %p273
      %p824 = pneg %p270
      %p825 = scmp.lt.s32.totalorder %s37, 1
      %s826 = scalar_select %p825, %s37, 1
      %s827 = scalar_lea.vmem %s9, %s826
      %p828 = pneg %p299
      %p829 = pneg %p296
      %p830 = scmp.lt.s32.totalorder %s37, 1
      %s831 = scalar_select %p830, %s37, 1
      %s832 = scalar_lea.vmem %s10, %s831
      %p833 = pneg %p325
      %p834 = pneg %p322
      %p835 = scmp.lt.s32.totalorder %s37, 1
      %s836 = scalar_select %p835, %s37, 1
      %s837 = smul.addr %s836, 4
      %s838 = smul.addr %s837, 4
      %s839 = scalar_lea.vmem %s11, %s838
      %p840 = pneg %p351
      %p841 = pneg %p348
      %p842 = scmp.lt.s32.totalorder %s37, 1
      %s843 = scalar_select %p842, %s37, 1
      %s844 = scalar_lea.vmem %s12, %s843
      %p845 = pneg %p377
      %p846 = pneg %p374
      %p847 = scmp.lt.s32.totalorder %s37, 1
      %s848 = scalar_select %p847, %s37, 1
      %s849 = scalar_lea.vmem %s13, %s848
      %p850 = pneg %p403
      %p851 = pneg %p400
      %p852 = scmp.lt.s32.totalorder %s37, 1
      %s853 = scalar_select %p852, %s37, 1
      %s854 = scalar_lea.vmem %s14, %s853
      %p855 = pneg %p429
      %p856 = pneg %p426
      %p857 = scmp.lt.s32.totalorder %s37, 1
      %s858 = scalar_select %p857, %s37, 1
      %s859 = smul.addr %s858, 4
      %s860 = smul.addr %s859, 4
      %s861 = scalar_lea.vmem %s15, %s860
      %p862 = pneg %p455
      %p863 = pneg %p452
      %p864 = scmp.lt.s32.totalorder %s37, 1
      %s865 = scalar_select %p864, %s37, 1
      %s866 = scalar_lea.vmem %s16, %s865
      %p867 = pneg %p481
      %p868 = pneg %p478
      %p869 = scmp.lt.s32.totalorder %s37, 1
      %s870 = scalar_select %p869, %s37, 1
      %s871 = smul.addr %s870, 4
      %s872 = smul.addr %s871, 4
      %s873 = scalar_lea.vmem %s17, %s872
      %p874 = pneg %p507
      %p875 = pneg %p504
      %p876 = scmp.lt.s32.totalorder %s37, 1
      %s877 = scalar_select %p876, %s37, 1
      %s878 = scalar_lea.vmem %s18, %s877
      %p879 = pneg %p533
      %p880 = pneg %p530
      %p881 = pneg %p554
      %p882 = pneg %p551
      %p883 = pneg %p575
      %p884 = pneg %p572
      %p885 = pneg %p601
      %p886 = pneg %p598
      %s887 = smul.u32 2, %s36
      %p888 = scmp.lt.s32.totalorder %s887, 1
      %s889 = scalar_select %p888, %s887, 1
      %s890 = smul.addr %s889, 8
      %s891 = scalar_lea.vmem %s21, %s890
      %s892 = smul.u32 2, %s36
      %p893 = scmp.lt.s32.totalorder %s892, 1
      %s894 = scalar_select %p893, %s892, 1
      %s895 = smul.addr %s894, 8
      %s896 = scalar_lea.vmem %s0, %s895
      %s897 = smul.u32 2, %s36
      %s898 = smul.u32 2, %s36
      %p899 = scmp.lt.s32.totalorder %s898, 1
      %s900 = scalar_select %p899, %s898, 1
      %s901 = smul.addr %s900, 8
      %s902 = scalar_lea.vmem %s1, %s901
      %s903 = smul.u32 2, %s36
      %s904 = smul.u32 2, %s36
      %p905 = scmp.lt.s32.totalorder %s904, 1
      %s906 = scalar_select %p905, %s904, 1
      %s907 = smul.addr %s906, 8
      %s908 = scalar_lea.vmem %s2, %s907
      %s909 = smul.u32 2, %s36
      %p910 = scmp.lt.s32.totalorder %s37, 1
      %s911 = scalar_select %p910, %s37, 1
      %s912 = scalar_lea.vmem %s3, %s911
      %p913 = scmp.lt.s32.totalorder %s37, 1
      %s914 = scalar_select %p913, %s37, 1
      %s915 = scalar_lea.vmem %s4, %s914
      %p916 = scmp.lt.s32.totalorder %s37, 1
      %s917 = scalar_select %p916, %s37, 1
      %s918 = smul.addr %s917, 4
      %s919 = smul.addr %s918, 4
      %s920 = scalar_lea.vmem %s5, %s919
      %p921 = scmp.lt.s32.totalorder %s37, 1
      %s922 = scalar_select %p921, %s37, 1
      %s923 = smul.addr %s922, 4
      %s924 = smul.addr %s923, 4
      %s925 = scalar_lea.vmem %s6, %s924
      %p926 = scmp.lt.s32.totalorder %s37, 1
      %s927 = scalar_select %p926, %s37, 1
      %s928 = smul.addr %s927, 4
      %s929 = smul.addr %s928, 4
      %s930 = scalar_lea.vmem %s7, %s929
      %p931 = scmp.lt.s32.totalorder %s37, 1
      %s932 = scalar_select %p931, %s37, 1
      %s933 = scalar_lea.vmem %s8, %s932
      %p934 = scmp.lt.s32.totalorder %s37, 1
      %s935 = scalar_select %p934, %s37, 1
      %s936 = scalar_lea.vmem %s9, %s935
      %p937 = scmp.lt.s32.totalorder %s37, 1
      %s938 = scalar_select %p937, %s37, 1
      %s939 = scalar_lea.vmem %s10, %s938
      %p940 = scmp.lt.s32.totalorder %s37, 1
      %s941 = scalar_select %p940, %s37, 1
      %s942 = smul.addr %s941, 4
      %s943 = smul.addr %s942, 4
      %s944 = scalar_lea.vmem %s11, %s943
      %p945 = scmp.lt.s32.totalorder %s37, 1
      %s946 = scalar_select %p945, %s37, 1
      %s947 = scalar_lea.vmem %s12, %s946
      %p948 = scmp.lt.s32.totalorder %s37, 1
      %s949 = scalar_select %p948, %s37, 1
      %s950 = scalar_lea.vmem %s13, %s949
      %p951 = scmp.lt.s32.totalorder %s37, 1
      %s952 = scalar_select %p951, %s37, 1
      %s953 = scalar_lea.vmem %s14, %s952
      %p954 = scmp.lt.s32.totalorder %s37, 1
      %s955 = scalar_select %p954, %s37, 1
      %s956 = smul.addr %s955, 4
      %s957 = smul.addr %s956, 4
      %s958 = scalar_lea.vmem %s15, %s957
      %p959 = scmp.lt.s32.totalorder %s37, 1
      %s960 = scalar_select %p959, %s37, 1
      %s961 = scalar_lea.vmem %s16, %s960
      %p962 = scmp.lt.s32.totalorder %s37, 1
      %s963 = scalar_select %p962, %s37, 1
      %s964 = smul.addr %s963, 4
      %s965 = smul.addr %s964, 4
      %s966 = scalar_lea.vmem %s17, %s965
      %p967 = scmp.lt.s32.totalorder %s37, 1
      %s968 = scalar_select %p967, %s37, 1
      %s969 = scalar_lea.vmem %s18, %s968
      %s970 = smul.u32 2, %s36
      %p971 = scmp.lt.s32.totalorder %s970, 1
      %s972 = scalar_select %p971, %s970, 1
      %s973 = smul.addr %s972, 8
      %s974 = scalar_lea.vmem %s21, %s973
      %s975 = smul.u32 2, %s36
      %v977 = vld [vmem:[%s908] sm:$0xff]
      %v978 = vld [vmem:[%s908 + $0x8] sm:$0xff]
      %p979 = scmp.eq.s32.totalorder %s37, 0
      // Predicated region
      $region105: #{bert4rec_forward.1} parent=103 // pred_check
        %p980 = pneg %p979
      $region106: #{bert4rec_forward.1} parent=103 // pred_check_branch
        %982 = sbr.rel (%p980) target = $region108
      $region107: #{bert4rec_forward.1} parent=103 // pred_region
        %v983 = vld [vmem:[%s896] sm:$0xff]
        %v984 = vld [vmem:[%s896 + $0x8] sm:$0xff]
        %v985 = vmul.f32 %v983, 5.656854
        %v986 = vmul.f32 %v984, 5.656854
        %v987 = vld [vmem:[%s902] sm:$0xff]
        %v988 = vld [vmem:[%s902 + $0x8] sm:$0xff]
        %v989 = vadd.f32 %v985, %v987
        %v990 = vadd.f32 %v986, %v988
        %992 = vset.pattern.permute.xlu0 0
        %993 = vperm.xlu0 %992, %v977
        %v994 = vpop.permute.xlu0 %993
        %997 = vset.pattern.permute.xlu0 0
        %998 = vperm.xlu0 %997, %v978
        %v999 = vpop.permute.xlu0 %998
        %v1001 = vmul.f32 %v989, %v994
        %v1002 = vmul.f32 %v990, %v999
        %vm1003 = vcmask 261120
        %1004 = vst.msk [vmem:[%s974] sm:$0xff] %vm1003, %v1001
        %1005 = vst.msk [vmem:[%s974 + $0x8] sm:$0xff] %vm1003, %v1002
      $region108: #{bert4rec_forward.1} parent=103 // pred_fallthru
        _
      %v1006 = vld [vmem:[%s974] sm:$0xff]
      %v1007 = vld [vmem:[%s974 + $0x8] sm:$0xff]
      %v1008 = vld [vmem:[%s912] sm:$0x1]
      %v1009 = vld [vmem:[%s915] sm:$0x1]
      %vm1010 = vcmask 261120
      %v1011 = vsel %vm1010, %v1006, 0.0
      %1012 = vadd.xlane.f32.xlu0 %v1011
      %v1013 = vpop.xlane.xlu0 %1012
      %v1014 = vsel %vm1010, %v1007, 0.0
      %1015 = vadd.xlane.f32.xlu0 %v1014
      %v1016 = vpop.xlane.xlu0 %1015
      %v1017 = vrcp.pop 32.0
      %v1018 = vmul.f32 %v1013, %v1017
      %v1019 = vmul.f32 %v1016, %v1017
      %v1020 = vsub.f32 %v1006, %v1018
      %v1021 = vsub.f32 %v1007, %v1019
      %v1022 = vmul.f32 %v1020, %v1020
      %v1023 = vmul.f32 %v1021, %v1021
      %v1024 = vsel %vm1010, %v1022, 0.0
      %1025 = vadd.xlane.f32.xlu0 %v1024
      %v1026 = vpop.xlane.xlu0 %1025
      %v1027 = vsel %vm1010, %v1023, 0.0
      %1028 = vadd.xlane.f32.xlu0 %v1027
      %v1029 = vpop.xlane.xlu0 %1028
      %v1030 = vmul.f32 %v1026, %v1017
      %v1031 = vmul.f32 %v1029, %v1017
      %v1032 = vadd.f32 %v1030, 1e-08
      %v1033 = vadd.f32 %v1031, 1e-08
      %v1034 = vrsqrt.pop %v1032
      %v1035 = vrsqrt.pop %v1033
      %v1036 = vmul.f32 %v1020, %v1034
      %v1037 = vmul.f32 %v1021, %v1035
      %v1039 = vlaneseq
      %v1040 = vshrl.u32 %v1039, 7
      %v1041 = vsub.s32 0, %v1040
      %v1042 = vrot.slane %v1008, %v1041
      %v1044 = vmul.f32 %v1036, %v1042
      %v1045 = vmul.f32 %v1037, %v1042
      %v1047 = vlaneseq
      %v1048 = vshrl.u32 %v1047, 7
      %v1049 = vsub.s32 0, %v1048
      %v1050 = vrot.slane %v1009, %v1049
      %v1052 = vadd.f32 %v1044, %v1050
      %v1053 = vadd.f32 %v1045, %v1050
      %v1054 = vpack.c.bf16 %v1053, %v1052
      %v1055 = vld [vmem:[%s920] sm:$0xf]
      %v1056 = vld [vmem:[%s920 + $0x4] sm:$0xf]
      %v1057 = vld [vmem:[%s920 + $0x8] sm:$0xf]
      %v1058 = vld [vmem:[%s920 + $0xc] sm:$0xf]
      %v1059 = vld [vmem:[%s933] sm:$0x1]
      %v1061 = vlaneseq
      %v1062 = vshrl.u32 %v1061, 7
      %v1063 = vsub.s32 0, %v1062
      %v1064 = vrot.slane %v1059, %v1063
      %v1070 = vunpack.c.l.b16 %v1055
      %v1071 = vunpack.c.l.b16 %v1056
      %v1072 = vunpack.c.l.b16 %v1057
      %v1073 = vunpack.c.l.b16 %v1058
      %v1074 = vpack.c.b16 %v1071, %v1070
      %v1075 = vpack.c.b16 %v1073, %v1072
      %v1079 = vsel %vm1010, %v1054, 0
      %1081 = vmatprep.subr.bf16.mxu0 0
      %1082 = vmatpush1.bf16.msra.mxu0 0
      %1083 = vmatprep.subr.bf16.mxu0 0
      %1084 = vmatpush1.bf16.msra.mxu0 0
      %1085 = vmatprep.subr.bf16.mxu0 0
      %1086 = vmatpush1.bf16.msra.mxu0 0
      %1087 = vmatprep.subr.bf16.mxu0 0
      %1088 = vmatpush1.bf16.msra.mxu0 0
      %1089 = vmatprep.subr.bf16.mxu0 0
      %1090 = vmatpush1.bf16.msra.mxu0 0
      %1091 = vmatprep.subr.bf16.mxu0 0
      %1092 = vmatpush1.bf16.msra.mxu0 0
      %1093 = vmatprep.subr.bf16.mxu0 0
      %1094 = vmatpush1.bf16.msra.mxu0 %v1075
      %1095 = vmatprep.subr.bf16.mxu0 0
      %1096 = vmatpush1.bf16.msra.mxu0 %v1074
      %1097 = vmatprep.subr.bf16.mxu0 0
      %1098 = vmatpush2.bf16.msra.mxu0 0
      %1099 = vmatprep.subr.bf16.mxu0 0
      %1100 = vmatpush2.bf16.msra.mxu0 0
      %1101 = vmatprep.subr.bf16.mxu0 0
      %1102 = vmatpush2.bf16.msra.mxu0 0
      %1103 = vmatprep.subr.bf16.mxu0 0
      %1104 = vmatpush2.bf16.msra.mxu0 0
      %1105 = vmatprep.subr.bf16.mxu0 0
      %1106 = vmatpush2.bf16.msra.mxu0 0
      %1107 = vmatprep.subr.bf16.mxu0 0
      %1108 = vmatpush2.bf16.msra.mxu0 0
      %1109 = vmatprep.subr.bf16.mxu0 0
      %1110 = vmatpush2.bf16.msra.mxu0 0
      %1111 = vmatprep.subr.bf16.mxu0 0
      %1112 = vmatpush2.bf16.msra.mxu0 0
      %1113 = vmatprep.mubr.bf16.mxu0 0
      %1114 = vmatmul.mubr.bf16.gmra.mxu0 %v1079
      %v1115 = vpop.f32.mrf.mxu0
      %v1116 = vadd.f32 %v1064, %v1115
      %v1117 = vpop.f32.mrf.mxu0
      %v1118 = vpop.f32.mrf.mxu0
      %v1119 = vadd.f32 %v1064, %v1118
      %v1120 = vpop.f32.mrf.mxu0
      %1121 = vdwg.mxu0
      %v1122 = vpack.c.bf16 %v1007, %v1006
      %v1123 = vld [vmem:[%s925] sm:$0xf]
      %v1124 = vld [vmem:[%s925 + $0x4] sm:$0xf]
      %v1125 = vld [vmem:[%s925 + $0x8] sm:$0xf]
      %v1126 = vld [vmem:[%s925 + $0xc] sm:$0xf]
      %v1127 = vld [vmem:[%s936] sm:$0x1]
      %v1129 = vlaneseq
      %v1130 = vshrl.u32 %v1129, 7
      %v1131 = vsub.s32 0, %v1130
      %v1132 = vrot.slane %v1127, %v1131
      %v1138 = vunpack.c.l.b16 %v1123
      %v1139 = vunpack.c.l.b16 %v1124
      %v1140 = vunpack.c.l.b16 %v1125
      %v1141 = vunpack.c.l.b16 %v1126
      %v1142 = vpack.c.b16 %v1139, %v1138
      %v1143 = vpack.c.b16 %v1141, %v1140
      %v1147 = vsel %vm1010, %v1122, 0
      %1149 = vmatprep.subr.bf16.mxu0 0
      %1150 = vmatpush1.bf16.msra.mxu0 0
      %1151 = vmatprep.subr.bf16.mxu0 0
      %1152 = vmatpush1.bf16.msra.mxu0 0
      %1153 = vmatprep.subr.bf16.mxu0 0
      %1154 = vmatpush1.bf16.msra.mxu0 0
      %1155 = vmatprep.subr.bf16.mxu0 0
      %1156 = vmatpush1.bf16.msra.mxu0 0
      %1157 = vmatprep.subr.bf16.mxu0 0
      %1158 = vmatpush1.bf16.msra.mxu0 0
      %1159 = vmatprep.subr.bf16.mxu0 0
      %1160 = vmatpush1.bf16.msra.mxu0 0
      %1161 = vmatprep.subr.bf16.mxu0 0
      %1162 = vmatpush1.bf16.msra.mxu0 %v1143
      %1163 = vmatprep.subr.bf16.mxu0 0
      %1164 = vmatpush1.bf16.msra.mxu0 %v1142
      %1165 = vmatprep.subr.bf16.mxu0 0
      %1166 = vmatpush2.bf16.msra.mxu0 0
      %1167 = vmatprep.subr.bf16.mxu0 0
      %1168 = vmatpush2.bf16.msra.mxu0 0
      %1169 = vmatprep.subr.bf16.mxu0 0
      %1170 = vmatpush2.bf16.msra.mxu0 0
      %1171 = vmatprep.subr.bf16.mxu0 0
      %1172 = vmatpush2.bf16.msra.mxu0 0
      %1173 = vmatprep.subr.bf16.mxu0 0
      %1174 = vmatpush2.bf16.msra.mxu0 0
      %1175 = vmatprep.subr.bf16.mxu0 0
      %1176 = vmatpush2.bf16.msra.mxu0 0
      %1177 = vmatprep.subr.bf16.mxu0 0
      %1178 = vmatpush2.bf16.msra.mxu0 0
      %1179 = vmatprep.subr.bf16.mxu0 0
      %1180 = vmatpush2.bf16.msra.mxu0 0
      %1181 = vmatprep.mubr.bf16.mxu0 0
      %1182 = vmatmul.mubr.bf16.gmra.mxu0 %v1147
      %v1183 = vpop.f32.mrf.mxu0
      %v1184 = vadd.f32 %v1132, %v1183
      %v1185 = vpop.f32.mrf.mxu0
      %v1186 = vpop.f32.mrf.mxu0
      %v1187 = vadd.f32 %v1132, %v1186
      %v1188 = vpop.f32.mrf.mxu0
      %1189 = vdwg.mxu0
      %v1190 = vld [vmem:[%s930] sm:$0xf]
      %v1191 = vld [vmem:[%s930 + $0x4] sm:$0xf]
      %v1192 = vld [vmem:[%s930 + $0x8] sm:$0xf]
      %v1193 = vld [vmem:[%s930 + $0xc] sm:$0xf]
      %v1194 = vld [vmem:[%s939] sm:$0x1]
      %v1196 = vlaneseq
      %v1197 = vshrl.u32 %v1196, 7
      %v1198 = vsub.s32 0, %v1197
      %v1199 = vrot.slane %v1194, %v1198
      %v1205 = vunpack.c.l.b16 %v1190
      %v1206 = vunpack.c.l.b16 %v1191
      %v1207 = vunpack.c.l.b16 %v1192
      %v1208 = vunpack.c.l.b16 %v1193
      %v1209 = vpack.c.b16 %v1206, %v1205
      %v1210 = vpack.c.b16 %v1208, %v1207
      %1213 = vmatprep.subr.bf16.mxu0 0
      %1214 = vmatpush1.bf16.msra.mxu0 0
      %1215 = vmatprep.subr.bf16.mxu0 0
      %1216 = vmatpush1.bf16.msra.mxu0 0
      %1217 = vmatprep.subr.bf16.mxu0 0
      %1218 = vmatpush1.bf16.msra.mxu0 0
      %1219 = vmatprep.subr.bf16.mxu0 0
      %1220 = vmatpush1.bf16.msra.mxu0 0
      %1221 = vmatprep.subr.bf16.mxu0 0
      %1222 = vmatpush1.bf16.msra.mxu0 0
      %1223 = vmatprep.subr.bf16.mxu0 0
      %1224 = vmatpush1.bf16.msra.mxu0 0
      %1225 = vmatprep.subr.bf16.mxu0 0
      %1226 = vmatpush1.bf16.msra.mxu0 %v1210
      %1227 = vmatprep.subr.bf16.mxu0 0
      %1228 = vmatpush1.bf16.msra.mxu0 %v1209
      %1229 = vmatprep.subr.bf16.mxu0 0
      %1230 = vmatpush2.bf16.msra.mxu0 0
      %1231 = vmatprep.subr.bf16.mxu0 0
      %1232 = vmatpush2.bf16.msra.mxu0 0
      %1233 = vmatprep.subr.bf16.mxu0 0
      %1234 = vmatpush2.bf16.msra.mxu0 0
      %1235 = vmatprep.subr.bf16.mxu0 0
      %1236 = vmatpush2.bf16.msra.mxu0 0
      %1237 = vmatprep.subr.bf16.mxu0 0
      %1238 = vmatpush2.bf16.msra.mxu0 0
      %1239 = vmatprep.subr.bf16.mxu0 0
      %1240 = vmatpush2.bf16.msra.mxu0 0
      %1241 = vmatprep.subr.bf16.mxu0 0
      %1242 = vmatpush2.bf16.msra.mxu0 0
      %1243 = vmatprep.subr.bf16.mxu0 0
      %1244 = vmatpush2.bf16.msra.mxu0 0
      %1245 = vmatprep.mubr.bf16.mxu0 0
      %1246 = vmatmul.mubr.bf16.gmra.mxu0 %v1147
      %v1247 = vpop.f32.mrf.mxu0
      %v1248 = vadd.f32 %v1199, %v1247
      %v1249 = vpop.f32.mrf.mxu0
      %v1250 = vpop.f32.mrf.mxu0
      %v1251 = vadd.f32 %v1199, %v1250
      %v1252 = vpop.f32.mrf.mxu0
      %1253 = vdwg.mxu0
      %1256 = vrot.lane.b32.xlu0 %v1116, 112
      %v1257 = vpop.permute.xlu0 %1256
      %1258 = vrot.lane.b32.xlu0 %v1119, 112
      %v1259 = vpop.permute.xlu0 %1258
      %v1262 = vpack.c.bf16 %v1116, %v1116
      %v1263 = vpack.c.bf16 %v1119, %v1119
      %v1264 = vpack.c.bf16 %v1257, %v1257
      %v1265 = vpack.c.bf16 %v1259, %v1259
      %1268 = vrot.lane.b32.xlu0 %v1184, 112
      %v1269 = vpop.permute.xlu0 %1268
      %1270 = vrot.lane.b32.xlu0 %v1187, 112
      %v1271 = vpop.permute.xlu0 %1270
      %v1274 = vpack.c.bf16 %v1184, %v1184
      %v1275 = vpack.c.bf16 %v1187, %v1187
      %v1276 = vpack.c.bf16 %v1269, %v1269
      %v1277 = vpack.c.bf16 %v1271, %v1271
      %1280 = vrot.lane.b32.xlu0 %v1248, 112
      %v1281 = vpop.permute.xlu0 %1280
      %1282 = vrot.lane.b32.xlu0 %v1251, 112
      %v1283 = vpop.permute.xlu0 %1282
      %v1286 = vpack.c.bf16 %v1248, %v1248
      %v1287 = vpack.c.bf16 %v1251, %v1251
      %v1288 = vpack.c.bf16 %v1281, %v1281
      %v1289 = vpack.c.bf16 %v1283, %v1283
      %vm1290 = vcmask 130048
      %v1292 = vsel %vm1290, %v1262, 0
      %v1295 = vsel %vm1290, %v1274, 0
      %1297 = vmatprep.subr.bf16.mxu0 0
      %1298 = vmatpush1.bf16.xpose.msra.mxu0 0
      %1299 = vmatprep.subr.bf16.mxu0 0
      %1300 = vmatpush1.bf16.xpose.msra.mxu0 0
      %1301 = vmatprep.subr.bf16.mxu0 0
      %1302 = vmatpush1.bf16.xpose.msra.mxu0 0
      %1303 = vmatprep.subr.bf16.mxu0 0
      %1304 = vmatpush1.bf16.xpose.msra.mxu0 0
      %1305 = vmatprep.subr.bf16.mxu0 0
      %1306 = vmatpush1.bf16.xpose.msra.mxu0 0
      %1307 = vmatprep.subr.bf16.mxu0 0
      %1308 = vmatpush1.bf16.xpose.msra.mxu0 0
      %1309 = vmatprep.subr.bf16.mxu0 0
      %1310 = vmatpush1.bf16.xpose.msra.mxu0 0
      %1311 = vmatprep.subr.bf16.mxu0 0
      %1312 = vmatpush1.bf16.xpose.msra.mxu0 %v1295
      %1313 = vmatprep.subr.bf16.mxu0 0
      %1314 = vmatpush2.bf16.xpose.msra.mxu0 0
      %1315 = vmatprep.subr.bf16.mxu0 0
      %1316 = vmatpush2.bf16.xpose.msra.mxu0 0
      %1317 = vmatprep.subr.bf16.mxu0 0
      %1318 = vmatpush2.bf16.xpose.msra.mxu0 0
      %1319 = vmatprep.subr.bf16.mxu0 0
      %1320 = vmatpush2.bf16.xpose.msra.mxu0 0
      %1321 = vmatprep.subr.bf16.mxu0 0
      %1322 = vmatpush2.bf16.xpose.msra.mxu0 0
      %1323 = vmatprep.subr.bf16.mxu0 0
      %1324 = vmatpush2.bf16.xpose.msra.mxu0 0
      %1325 = vmatprep.subr.bf16.mxu0 0
      %1326 = vmatpush2.bf16.xpose.msra.mxu0 0
      %1327 = vmatprep.subr.bf16.mxu0 0
      %1328 = vmatpush2.bf16.xpose.msra.mxu0 0
      %1329 = vmatprep.mubr.bf16.mxu0 0
      %1330 = vmatmul.mubr.bf16.gmra.mxu0 %v1292
      %v1331 = vpop.f32.mrf.mxu0
      %v1332 = vadd.f32 0.0, %v1331
      %v1333 = vpop.f32.mrf.mxu0
      %v1334 = vpop.f32.mrf.mxu0
      %v1335 = vpop.f32.mrf.mxu0
      %1336 = vdwg.mxu0
      %v1338 = vsel %vm1290, %v1263, 0
      %v1341 = vsel %vm1290, %v1275, 0
      %1343 = vmatprep.subr.bf16.mxu0 0
      %1344 = vmatpush1.bf16.xpose.msra.mxu0 0
      %1345 = vmatprep.subr.bf16.mxu0 0
      %1346 = vmatpush1.bf16.xpose.msra.mxu0 0
      %1347 = vmatprep.subr.bf16.mxu0 0
      %1348 = vmatpush1.bf16.xpose.msra.mxu0 0
      %1349 = vmatprep.subr.bf16.mxu0 0
      %1350 = vmatpush1.bf16.xpose.msra.mxu0 0
      %1351 = vmatprep.subr.bf16.mxu0 0
      %1352 = vmatpush1.bf16.xpose.msra.mxu0 0
      %1353 = vmatprep.subr.bf16.mxu0 0
      %1354 = vmatpush1.bf16.xpose.msra.mxu0 0
      %1355 = vmatprep.subr.bf16.mxu0 0
      %1356 = vmatpush1.bf16.xpose.msra.mxu0 0
      %1357 = vmatprep.subr.bf16.mxu0 0
      %1358 = vmatpush1.bf16.xpose.msra.mxu0 %v1341
      %1359 = vmatprep.subr.bf16.mxu0 0
      %1360 = vmatpush2.bf16.xpose.msra.mxu0 0
      %1361 = vmatprep.subr.bf16.mxu0 0
      %1362 = vmatpush2.bf16.xpose.msra.mxu0 0
      %1363 = vmatprep.subr.bf16.mxu0 0
      %1364 = vmatpush2.bf16.xpose.msra.mxu0 0
      %1365 = vmatprep.subr.bf16.mxu0 0
      %1366 = vmatpush2.bf16.xpose.msra.mxu0 0
      %1367 = vmatprep.subr.bf16.mxu0 0
      %1368 = vmatpush2.bf16.xpose.msra.mxu0 0
      %1369 = vmatprep.subr.bf16.mxu0 0
      %1370 = vmatpush2.bf16.xpose.msra.mxu0 0
      %1371 = vmatprep.subr.bf16.mxu0 0
      %1372 = vmatpush2.bf16.xpose.msra.mxu0 0
      %1373 = vmatprep.subr.bf16.mxu0 0
      %1374 = vmatpush2.bf16.xpose.msra.mxu0 0
      %1375 = vmatprep.mubr.bf16.mxu0 0
      %1376 = vmatmul.mubr.bf16.gmra.mxu0 %v1338
      %v1377 = vpop.f32.mrf.mxu0
      %v1378 = vadd.f32 0.0, %v1377
      %v1379 = vpop.f32.mrf.mxu0
      %v1380 = vpop.f32.mrf.mxu0
      %v1381 = vpop.f32.mrf.mxu0
      %1382 = vdwg.mxu0
      %v1384 = vsel %vm1290, %v1264, 0
      %v1387 = vsel %vm1290, %v1276, 0
      %1389 = vmatprep.subr.bf16.mxu0 0
      %1390 = vmatpush1.bf16.xpose.msra.mxu0 0
      %1391 = vmatprep.subr.bf16.mxu0 0
      %1392 = vmatpush1.bf16.xpose.msra.mxu0 0
      %1393 = vmatprep.subr.bf16.mxu0 0
      %1394 = vmatpush1.bf16.xpose.msra.mxu0 0
      %1395 = vmatprep.subr.bf16.mxu0 0
      %1396 = vmatpush1.bf16.xpose.msra.mxu0 0
      %1397 = vmatprep.subr.bf16.mxu0 0
      %1398 = vmatpush1.bf16.xpose.msra.mxu0 0
      %1399 = vmatprep.subr.bf16.mxu0 0
      %1400 = vmatpush1.bf16.xpose.msra.mxu0 0
      %1401 = vmatprep.subr.bf16.mxu0 0
      %1402 = vmatpush1.bf16.xpose.msra.mxu0 0
      %1403 = vmatprep.subr.bf16.mxu0 0
      %1404 = vmatpush1.bf16.xpose.msra.mxu0 %v1387
      %1405 = vmatprep.subr.bf16.mxu0 0
      %1406 = vmatpush2.bf16.xpose.msra.mxu0 0
      %1407 = vmatprep.subr.bf16.mxu0 0
      %1408 = vmatpush2.bf16.xpose.msra.mxu0 0
      %1409 = vmatprep.subr.bf16.mxu0 0
      %1410 = vmatpush2.bf16.xpose.msra.mxu0 0
      %1411 = vmatprep.subr.bf16.mxu0 0
      %1412 = vmatpush2.bf16.xpose.msra.mxu0 0
      %1413 = vmatprep.subr.bf16.mxu0 0
      %1414 = vmatpush2.bf16.xpose.msra.mxu0 0
      %1415 = vmatprep.subr.bf16.mxu0 0
      %1416 = vmatpush2.bf16.xpose.msra.mxu0 0
      %1417 = vmatprep.subr.bf16.mxu0 0
      %1418 = vmatpush2.bf16.xpose.msra.mxu0 0
      %1419 = vmatprep.subr.bf16.mxu0 0
      %1420 = vmatpush2.bf16.xpose.msra.mxu0 0
      %1421 = vmatprep.mubr.bf16.mxu0 0
      %1422 = vmatmul.mubr.bf16.gmra.mxu0 %v1384
      %v1423 = vpop.f32.mrf.mxu0
      %v1424 = vadd.f32 0.0, %v1423
      %v1425 = vpop.f32.mrf.mxu0
      %v1426 = vpop.f32.mrf.mxu0
      %v1427 = vpop.f32.mrf.mxu0
      %1428 = vdwg.mxu0
      %v1430 = vsel %vm1290, %v1265, 0
      %v1433 = vsel %vm1290, %v1277, 0
      %1435 = vmatprep.subr.bf16.mxu0 0
      %1436 = vmatpush1.bf16.xpose.msra.mxu0 0
      %1437 = vmatprep.subr.bf16.mxu0 0
      %1438 = vmatpush1.bf16.xpose.msra.mxu0 0
      %1439 = vmatprep.subr.bf16.mxu0 0
      %1440 = vmatpush1.bf16.xpose.msra.mxu0 0
      %1441 = vmatprep.subr.bf16.mxu0 0
      %1442 = vmatpush1.bf16.xpose.msra.mxu0 0
      %1443 = vmatprep.subr.bf16.mxu0 0
      %1444 = vmatpush1.bf16.xpose.msra.mxu0 0
      %1445 = vmatprep.subr.bf16.mxu0 0
      %1446 = vmatpush1.bf16.xpose.msra.mxu0 0
      %1447 = vmatprep.subr.bf16.mxu0 0
      %1448 = vmatpush1.bf16.xpose.msra.mxu0 0
      %1449 = vmatprep.subr.bf16.mxu0 0
      %1450 = vmatpush1.bf16.xpose.msra.mxu0 %v1433
      %1451 = vmatprep.subr.bf16.mxu0 0
      %1452 = vmatpush2.bf16.xpose.msra.mxu0 0
      %1453 = vmatprep.subr.bf16.mxu0 0
      %1454 = vmatpush2.bf16.xpose.msra.mxu0 0
      %1455 = vmatprep.subr.bf16.mxu0 0
      %1456 = vmatpush2.bf16.xpose.msra.mxu0 0
      %1457 = vmatprep.subr.bf16.mxu0 0
      %1458 = vmatpush2.bf16.xpose.msra.mxu0 0
      %1459 = vmatprep.subr.bf16.mxu0 0
      %1460 = vmatpush2.bf16.xpose.msra.mxu0 0
      %1461 = vmatprep.subr.bf16.mxu0 0
      %1462 = vmatpush2.bf16.xpose.msra.mxu0 0
      %1463 = vmatprep.subr.bf16.mxu0 0
      %1464 = vmatpush2.bf16.xpose.msra.mxu0 0
      %1465 = vmatprep.subr.bf16.mxu0 0
      %1466 = vmatpush2.bf16.xpose.msra.mxu0 0
      %1467 = vmatprep.mubr.bf16.mxu0 0
      %1468 = vmatmul.mubr.bf16.gmra.mxu0 %v1430
      %v1469 = vpop.f32.mrf.mxu0
      %v1470 = vadd.f32 0.0, %v1469
      %v1471 = vpop.f32.mrf.mxu0
      %v1472 = vpop.f32.mrf.mxu0
      %v1473 = vpop.f32.mrf.mxu0
      %1474 = vdwg.mxu0
      %v1475 = vmul.f32 %v1332, 0.25
      %v1476 = vmul.f32 %v1378, 0.25
      %v1477 = vmul.f32 %v1424, 0.25
      %v1478 = vmul.f32 %v1470, 0.25
      %vm1479 = vcmask 64512
      %v1480 = vsel %vm1479, %v1475, -inf
      %1481 = vmax.xlane.f32.xlu0 %v1480
      %v1482 = vpop.xlane.xlu0 %1481
      %v1483 = vsel %vm1479, %v1476, -inf
      %1484 = vmax.xlane.f32.xlu0 %v1483
      %v1485 = vpop.xlane.xlu0 %1484
      %v1486 = vsel %vm1479, %v1477, -inf
      %1487 = vmax.xlane.f32.xlu0 %v1486
      %v1488 = vpop.xlane.xlu0 %1487
      %v1489 = vsel %vm1479, %v1478, -inf
      %1490 = vmax.xlane.f32.xlu0 %v1489
      %v1491 = vpop.xlane.xlu0 %1490
      %v1492 = vsub.f32 %v1475, %v1482
      %v1493 = vsub.f32 %v1476, %v1485
      %v1494 = vsub.f32 %v1477, %v1488
      %v1495 = vsub.f32 %v1478, %v1491
      %v1496 = vmul.f32 %v1492, 1.442695
      %v1497 = vpow.pop %v1496
      %v1498 = vmul.f32 %v1493, 1.442695
      %v1499 = vpow.pop %v1498
      %v1500 = vmul.f32 %v1494, 1.442695
      %v1501 = vpow.pop %v1500
      %v1502 = vmul.f32 %v1495, 1.442695
      %v1503 = vpow.pop %v1502
      %v1504 = vsel %vm1479, %v1497, 0.0
      %1505 = vadd.xlane.f32.xlu0 %v1504
      %v1506 = vpop.xlane.xlu0 %1505
      %v1507 = vsel %vm1479, %v1499, 0.0
      %1508 = vadd.xlane.f32.xlu0 %v1507
      %v1509 = vpop.xlane.xlu0 %1508
      %v1510 = vsel %vm1479, %v1501, 0.0
      %1511 = vadd.xlane.f32.xlu0 %v1510
      %v1512 = vpop.xlane.xlu0 %1511
      %v1513 = vsel %vm1479, %v1503, 0.0
      %1514 = vadd.xlane.f32.xlu0 %v1513
      %v1515 = vpop.xlane.xlu0 %1514
      %v1516 = vrcp.pop %v1506
      %v1517 = vrcp.pop %v1509
      %v1518 = vrcp.pop %v1512
      %v1519 = vrcp.pop %v1515
      %v1520 = vmul.f32 %v1497, %v1516
      %v1521 = vmul.f32 %v1499, %v1517
      %v1522 = vmul.f32 %v1501, %v1518
      %v1523 = vmul.f32 %v1503, %v1519
      %v1524 = vpack.c.bf16 %v1520, %v1520
      %v1525 = vpack.c.bf16 %v1521, %v1521
      %v1526 = vpack.c.bf16 %v1522, %v1522
      %v1527 = vpack.c.bf16 %v1523, %v1523
      %v1529 = vsel %vm1479, %v1524, 0
      %vm1531 = vcmask 1043456
      %v1533 = vsel %vm1531, %v1286, 0
      %1535 = vmatprep.subr.bf16.mxu0 0
      %1536 = vmatpush1.bf16.msra.mxu0 0
      %1537 = vmatprep.subr.bf16.mxu0 0
      %1538 = vmatpush1.bf16.msra.mxu0 0
      %1539 = vmatprep.subr.bf16.mxu0 0
      %1540 = vmatpush1.bf16.msra.mxu0 0
      %1541 = vmatprep.subr.bf16.mxu0 0
      %1542 = vmatpush1.bf16.msra.mxu0 0
      %1543 = vmatprep.subr.bf16.mxu0 0
      %1544 = vmatpush1.bf16.msra.mxu0 0
      %1545 = vmatprep.subr.bf16.mxu0 0
      %1546 = vmatpush1.bf16.msra.mxu0 0
      %1547 = vmatprep.subr.bf16.mxu0 0
      %1548 = vmatpush1.bf16.msra.mxu0 0
      %1549 = vmatprep.subr.bf16.mxu0 0
      %1550 = vmatpush1.bf16.msra.mxu0 %v1533
      %1551 = vmatprep.subr.bf16.mxu0 0
      %1552 = vmatpush2.bf16.msra.mxu0 0
      %1553 = vmatprep.subr.bf16.mxu0 0
      %1554 = vmatpush2.bf16.msra.mxu0 0
      %1555 = vmatprep.subr.bf16.mxu0 0
      %1556 = vmatpush2.bf16.msra.mxu0 0
      %1557 = vmatprep.subr.bf16.mxu0 0
      %1558 = vmatpush2.bf16.msra.mxu0 0
      %1559 = vmatprep.subr.bf16.mxu0 0
      %1560 = vmatpush2.bf16.msra.mxu0 0
      %1561 = vmatprep.subr.bf16.mxu0 0
      %1562 = vmatpush2.bf16.msra.mxu0 0
      %1563 = vmatprep.subr.bf16.mxu0 0
      %1564 = vmatpush2.bf16.msra.mxu0 0
      %1565 = vmatprep.subr.bf16.mxu0 0
      %1566 = vmatpush2.bf16.msra.mxu0 0
      %1567 = vmatprep.mubr.bf16.mxu0 0
      %1568 = vmatmul.mubr.bf16.gmra.mxu0 %v1529
      %v1569 = vpop.f32.mrf.mxu0
      %v1570 = vadd.f32 0.0, %v1569
      %v1571 = vpop.f32.mrf.mxu0
      %v1572 = vpop.f32.mrf.mxu0
      %v1573 = vpop.f32.mrf.mxu0
      %1574 = vdwg.mxu0
      %v1576 = vsel %vm1479, %v1525, 0
      %v1579 = vsel %vm1531, %v1287, 0
      %1581 = vmatprep.subr.bf16.mxu0 0
      %1582 = vmatpush1.bf16.msra.mxu0 0
      %1583 = vmatprep.subr.bf16.mxu0 0
      %1584 = vmatpush1.bf16.msra.mxu0 0
      %1585 = vmatprep.subr.bf16.mxu0 0
      %1586 = vmatpush1.bf16.msra.mxu0 0
      %1587 = vmatprep.subr.bf16.mxu0 0
      %1588 = vmatpush1.bf16.msra.mxu0 0
      %1589 = vmatprep.subr.bf16.mxu0 0
      %1590 = vmatpush1.bf16.msra.mxu0 0
      %1591 = vmatprep.subr.bf16.mxu0 0
      %1592 = vmatpush1.bf16.msra.mxu0 0
      %1593 = vmatprep.subr.bf16.mxu0 0
      %1594 = vmatpush1.bf16.msra.mxu0 0
      %1595 = vmatprep.subr.bf16.mxu0 0
      %1596 = vmatpush1.bf16.msra.mxu0 %v1579
      %1597 = vmatprep.subr.bf16.mxu0 0
      %1598 = vmatpush2.bf16.msra.mxu0 0
      %1599 = vmatprep.subr.bf16.mxu0 0
      %1600 = vmatpush2.bf16.msra.mxu0 0
      %1601 = vmatprep.subr.bf16.mxu0 0
      %1602 = vmatpush2.bf16.msra.mxu0 0
      %1603 = vmatprep.subr.bf16.mxu0 0
      %1604 = vmatpush2.bf16.msra.mxu0 0
      %1605 = vmatprep.subr.bf16.mxu0 0
      %1606 = vmatpush2.bf16.msra.mxu0 0
      %1607 = vmatprep.subr.bf16.mxu0 0
      %1608 = vmatpush2.bf16.msra.mxu0 0
      %1609 = vmatprep.subr.bf16.mxu0 0
      %1610 = vmatpush2.bf16.msra.mxu0 0
      %1611 = vmatprep.subr.bf16.mxu0 0
      %1612 = vmatpush2.bf16.msra.mxu0 0
      %1613 = vmatprep.mubr.bf16.mxu0 0
      %1614 = vmatmul.mubr.bf16.gmra.mxu0 %v1576
      %v1615 = vpop.f32.mrf.mxu0
      %v1616 = vadd.f32 0.0, %v1615
      %v1617 = vpop.f32.mrf.mxu0
      %v1618 = vpop.f32.mrf.mxu0
      %v1619 = vpop.f32.mrf.mxu0
      %1620 = vdwg.mxu0
      %v1622 = vsel %vm1479, %v1526, 0
      %v1625 = vsel %vm1531, %v1288, 0
      %1627 = vmatprep.subr.bf16.mxu0 0
      %1628 = vmatpush1.bf16.msra.mxu0 0
      %1629 = vmatprep.subr.bf16.mxu0 0
      %1630 = vmatpush1.bf16.msra.mxu0 0
      %1631 = vmatprep.subr.bf16.mxu0 0
      %1632 = vmatpush1.bf16.msra.mxu0 0
      %1633 = vmatprep.subr.bf16.mxu0 0
      %1634 = vmatpush1.bf16.msra.mxu0 0
      %1635 = vmatprep.subr.bf16.mxu0 0
      %1636 = vmatpush1.bf16.msra.mxu0 0
      %1637 = vmatprep.subr.bf16.mxu0 0
      %1638 = vmatpush1.bf16.msra.mxu0 0
      %1639 = vmatprep.subr.bf16.mxu0 0
      %1640 = vmatpush1.bf16.msra.mxu0 0
      %1641 = vmatprep.subr.bf16.mxu0 0
      %1642 = vmatpush1.bf16.msra.mxu0 %v1625
      %1643 = vmatprep.subr.bf16.mxu0 0
      %1644 = vmatpush2.bf16.msra.mxu0 0
      %1645 = vmatprep.subr.bf16.mxu0 0
      %1646 = vmatpush2.bf16.msra.mxu0 0
      %1647 = vmatprep.subr.bf16.mxu0 0
      %1648 = vmatpush2.bf16.msra.mxu0 0
      %1649 = vmatprep.subr.bf16.mxu0 0
      %1650 = vmatpush2.bf16.msra.mxu0 0
      %1651 = vmatprep.subr.bf16.mxu0 0
      %1652 = vmatpush2.bf16.msra.mxu0 0
      %1653 = vmatprep.subr.bf16.mxu0 0
      %1654 = vmatpush2.bf16.msra.mxu0 0
      %1655 = vmatprep.subr.bf16.mxu0 0
      %1656 = vmatpush2.bf16.msra.mxu0 0
      %1657 = vmatprep.subr.bf16.mxu0 0
      %1658 = vmatpush2.bf16.msra.mxu0 0
      %1659 = vmatprep.mubr.bf16.mxu0 0
      %1660 = vmatmul.mubr.bf16.gmra.mxu0 %v1622
      %v1661 = vpop.f32.mrf.mxu0
      %v1662 = vadd.f32 0.0, %v1661
      %v1663 = vpop.f32.mrf.mxu0
      %v1664 = vpop.f32.mrf.mxu0
      %v1665 = vpop.f32.mrf.mxu0
      %1666 = vdwg.mxu0
      %v1668 = vsel %vm1479, %v1527, 0
      %v1671 = vsel %vm1531, %v1289, 0
      %1673 = vmatprep.subr.bf16.mxu0 0
      %1674 = vmatpush1.bf16.msra.mxu0 0
      %1675 = vmatprep.subr.bf16.mxu0 0
      %1676 = vmatpush1.bf16.msra.mxu0 0
      %1677 = vmatprep.subr.bf16.mxu0 0
      %1678 = vmatpush1.bf16.msra.mxu0 0
      %1679 = vmatprep.subr.bf16.mxu0 0
      %1680 = vmatpush1.bf16.msra.mxu0 0
      %1681 = vmatprep.subr.bf16.mxu0 0
      %1682 = vmatpush1.bf16.msra.mxu0 0
      %1683 = vmatprep.subr.bf16.mxu0 0
      %1684 = vmatpush1.bf16.msra.mxu0 0
      %1685 = vmatprep.subr.bf16.mxu0 0
      %1686 = vmatpush1.bf16.msra.mxu0 0
      %1687 = vmatprep.subr.bf16.mxu0 0
      %1688 = vmatpush1.bf16.msra.mxu0 %v1671
      %1689 = vmatprep.subr.bf16.mxu0 0
      %1690 = vmatpush2.bf16.msra.mxu0 0
      %1691 = vmatprep.subr.bf16.mxu0 0
      %1692 = vmatpush2.bf16.msra.mxu0 0
      %1693 = vmatprep.subr.bf16.mxu0 0
      %1694 = vmatpush2.bf16.msra.mxu0 0
      %1695 = vmatprep.subr.bf16.mxu0 0
      %1696 = vmatpush2.bf16.msra.mxu0 0
      %1697 = vmatprep.subr.bf16.mxu0 0
      %1698 = vmatpush2.bf16.msra.mxu0 0
      %1699 = vmatprep.subr.bf16.mxu0 0
      %1700 = vmatpush2.bf16.msra.mxu0 0
      %1701 = vmatprep.subr.bf16.mxu0 0
      %1702 = vmatpush2.bf16.msra.mxu0 0
      %1703 = vmatprep.subr.bf16.mxu0 0
      %1704 = vmatpush2.bf16.msra.mxu0 0
      %1705 = vmatprep.mubr.bf16.mxu0 0
      %1706 = vmatmul.mubr.bf16.gmra.mxu0 %v1668
      %v1707 = vpop.f32.mrf.mxu0
      %v1708 = vadd.f32 0.0, %v1707
      %v1709 = vpop.f32.mrf.mxu0
      %v1710 = vpop.f32.mrf.mxu0
      %v1711 = vpop.f32.mrf.mxu0
      %1712 = vdwg.mxu0
      %1715 = vrot.lane.b32.xlu0 %v1662, 16
      %v1716 = vpop.permute.xlu0 %1715
      %1717 = vrot.lane.b32.xlu0 %v1708, 16
      %v1718 = vpop.permute.xlu0 %1717
      %v1721 = vsel %vm1290, %v1570, %v1716
      %v1722 = vsel %vm1290, %v1616, %v1718
      %v1723 = vpack.c.bf16 %v1722, %v1721
      %v1724 = vld [vmem:[%s944] sm:$0xf]
      %v1725 = vld [vmem:[%s944 + $0x4] sm:$0xf]
      %v1726 = vld [vmem:[%s944 + $0x8] sm:$0xf]
      %v1727 = vld [vmem:[%s944 + $0xc] sm:$0xf]
      %v1728 = vld [vmem:[%s947] sm:$0x1]
      %v1730 = vlaneseq
      %v1731 = vshrl.u32 %v1730, 7
      %v1732 = vsub.s32 0, %v1731
      %v1733 = vrot.slane %v1728, %v1732
      %v1739 = vunpack.c.l.b16 %v1724
      %v1740 = vunpack.c.l.b16 %v1725
      %v1741 = vunpack.c.l.b16 %v1726
      %v1742 = vunpack.c.l.b16 %v1727
      %v1743 = vpack.c.b16 %v1740, %v1739
      %v1744 = vpack.c.b16 %v1742, %v1741
      %v1748 = vsel %vm1010, %v1723, 0
      %1750 = vmatprep.subr.bf16.mxu0 0
      %1751 = vmatpush1.bf16.msra.mxu0 0
      %1752 = vmatprep.subr.bf16.mxu0 0
      %1753 = vmatpush1.bf16.msra.mxu0 0
      %1754 = vmatprep.subr.bf16.mxu0 0
      %1755 = vmatpush1.bf16.msra.mxu0 0
      %1756 = vmatprep.subr.bf16.mxu0 0
      %1757 = vmatpush1.bf16.msra.mxu0 0
      %1758 = vmatprep.subr.bf16.mxu0 0
      %1759 = vmatpush1.bf16.msra.mxu0 0
      %1760 = vmatprep.subr.bf16.mxu0 0
      %1761 = vmatpush1.bf16.msra.mxu0 0
      %1762 = vmatprep.subr.bf16.mxu0 0
      %1763 = vmatpush1.bf16.msra.mxu0 %v1744
      %1764 = vmatprep.subr.bf16.mxu0 0
      %1765 = vmatpush1.bf16.msra.mxu0 %v1743
      %1766 = vmatprep.subr.bf16.mxu0 0
      %1767 = vmatpush2.bf16.msra.mxu0 0
      %1768 = vmatprep.subr.bf16.mxu0 0
      %1769 = vmatpush2.bf16.msra.mxu0 0
      %1770 = vmatprep.subr.bf16.mxu0 0
      %1771 = vmatpush2.bf16.msra.mxu0 0
      %1772 = vmatprep.subr.bf16.mxu0 0
      %1773 = vmatpush2.bf16.msra.mxu0 0
      %1774 = vmatprep.subr.bf16.mxu0 0
      %1775 = vmatpush2.bf16.msra.mxu0 0
      %1776 = vmatprep.subr.bf16.mxu0 0
      %1777 = vmatpush2.bf16.msra.mxu0 0
      %1778 = vmatprep.subr.bf16.mxu0 0
      %1779 = vmatpush2.bf16.msra.mxu0 0
      %1780 = vmatprep.subr.bf16.mxu0 0
      %1781 = vmatpush2.bf16.msra.mxu0 0
      %1782 = vmatprep.mubr.bf16.mxu0 0
      %1783 = vmatmul.mubr.bf16.gmra.mxu0 %v1748
      %v1784 = vpop.f32.mrf.mxu0
      %v1785 = vadd.f32 %v1733, %v1784
      %v1786 = vpop.f32.mrf.mxu0
      %v1787 = vpop.f32.mrf.mxu0
      %v1788 = vadd.f32 %v1733, %v1787
      %v1789 = vpop.f32.mrf.mxu0
      %1790 = vdwg.mxu0
      %v1791 = vadd.f32 %v1052, %v1785
      %v1792 = vadd.f32 %v1053, %v1788
      %v1793 = vld [vmem:[%s950] sm:$0x1]
      %v1794 = vld [vmem:[%s953] sm:$0x1]
      %v1795 = vsel %vm1010, %v1791, 0.0
      %1796 = vadd.xlane.f32.xlu0 %v1795
      %v1797 = vpop.xlane.xlu0 %1796
      %v1798 = vsel %vm1010, %v1792, 0.0
      %1799 = vadd.xlane.f32.xlu0 %v1798
      %v1800 = vpop.xlane.xlu0 %1799
      %v1801 = vmul.f32 %v1797, %v1017
      %v1802 = vmul.f32 %v1800, %v1017
      %v1803 = vsub.f32 %v1791, %v1801
      %v1804 = vsub.f32 %v1792, %v1802
      %v1805 = vmul.f32 %v1803, %v1803
      %v1806 = vmul.f32 %v1804, %v1804
      %v1807 = vsel %vm1010, %v1805, 0.0
      %1808 = vadd.xlane.f32.xlu0 %v1807
      %v1809 = vpop.xlane.xlu0 %1808
      %v1810 = vsel %vm1010, %v1806, 0.0
      %1811 = vadd.xlane.f32.xlu0 %v1810
      %v1812 = vpop.xlane.xlu0 %1811
      %v1813 = vmul.f32 %v1809, %v1017
      %v1814 = vmul.f32 %v1812, %v1017
      %v1815 = vadd.f32 %v1813, 1e-08
      %v1816 = vadd.f32 %v1814, 1e-08
      %v1817 = vrsqrt.pop %v1815
      %v1818 = vrsqrt.pop %v1816
      %v1819 = vmul.f32 %v1803, %v1817
      %v1820 = vmul.f32 %v1804, %v1818
      %v1822 = vlaneseq
      %v1823 = vshrl.u32 %v1822, 7
      %v1824 = vsub.s32 0, %v1823
      %v1825 = vrot.slane %v1793, %v1824
      %v1827 = vmul.f32 %v1819, %v1825
      %v1828 = vmul.f32 %v1820, %v1825
      %v1830 = vlaneseq
      %v1831 = vshrl.u32 %v1830, 7
      %v1832 = vsub.s32 0, %v1831
      %v1833 = vrot.slane %v1794, %v1832
      %v1835 = vadd.f32 %v1827, %v1833
      %v1836 = vadd.f32 %v1828, %v1833
      %v1837 = vpack.c.bf16 %v1836, %v1835
      %v1838 = vld [vmem:[%s958] sm:$0xf]
      %v1839 = vld [vmem:[%s958 + $0x4] sm:$0xf]
      %v1840 = vld [vmem:[%s958 + $0x8] sm:$0xf]
      %v1841 = vld [vmem:[%s958 + $0xc] sm:$0xf]
      %v1842 = vld [vmem:[%s961] sm:$0x1]
      %v1844 = vlaneseq
      %v1845 = vshrl.u32 %v1844, 7
      %v1846 = vsub.s32 0, %v1845
      %v1847 = vrot.slane %v1842, %v1846
      %v1853 = vunpack.c.l.b16 %v1838
      %v1854 = vunpack.c.l.b16 %v1839
      %v1855 = vunpack.c.l.b16 %v1840
      %v1856 = vunpack.c.l.b16 %v1841
      %v1857 = vpack.c.b16 %v1854, %v1853
      %v1858 = vpack.c.b16 %v1856, %v1855
      %v1862 = vsel %vm1010, %v1837, 0
      %1864 = vmatprep.subr.bf16.mxu0 0
      %1865 = vmatpush1.bf16.msra.mxu0 0
      %1866 = vmatprep.subr.bf16.mxu0 0
      %1867 = vmatpush1.bf16.msra.mxu0 0
      %1868 = vmatprep.subr.bf16.mxu0 0
      %1869 = vmatpush1.bf16.msra.mxu0 0
      %1870 = vmatprep.subr.bf16.mxu0 0
      %1871 = vmatpush1.bf16.msra.mxu0 0
      %1872 = vmatprep.subr.bf16.mxu0 0
      %1873 = vmatpush1.bf16.msra.mxu0 0
      %1874 = vmatprep.subr.bf16.mxu0 0
      %1875 = vmatpush1.bf16.msra.mxu0 0
      %1876 = vmatprep.subr.bf16.mxu0 0
      %1877 = vmatpush1.bf16.msra.mxu0 %v1858
      %1878 = vmatprep.subr.bf16.mxu0 0
      %1879 = vmatpush1.bf16.msra.mxu0 %v1857
      %1880 = vmatprep.subr.bf16.mxu0 0
      %1881 = vmatpush2.bf16.msra.mxu0 0
      %1882 = vmatprep.subr.bf16.mxu0 0
      %1883 = vmatpush2.bf16.msra.mxu0 0
      %1884 = vmatprep.subr.bf16.mxu0 0
      %1885 = vmatpush2.bf16.msra.mxu0 0
      %1886 = vmatprep.subr.bf16.mxu0 0
      %1887 = vmatpush2.bf16.msra.mxu0 0
      %1888 = vmatprep.subr.bf16.mxu0 0
      %1889 = vmatpush2.bf16.msra.mxu0 0
      %1890 = vmatprep.subr.bf16.mxu0 0
      %1891 = vmatpush2.bf16.msra.mxu0 0
      %1892 = vmatprep.subr.bf16.mxu0 0
      %1893 = vmatpush2.bf16.msra.mxu0 0
      %1894 = vmatprep.subr.bf16.mxu0 0
      %1895 = vmatpush2.bf16.msra.mxu0 0
      %1896 = vmatprep.mubr.bf16.mxu0 0
      %1897 = vmatmul.mubr.bf16.gmra.mxu0 %v1862
      %v1898 = vpop.f32.mrf.mxu0
      %v1899 = vadd.f32 %v1847, %v1898
      %v1900 = vpop.f32.mrf.mxu0
      %v1901 = vpop.f32.mrf.mxu0
      %v1902 = vadd.f32 %v1847, %v1901
      %v1903 = vpop.f32.mrf.mxu0
      %1904 = vdwg.mxu0
      %v1905 = vmax.f32 %v1899, 0.0
      %v1906 = vmax.f32 %v1902, 0.0
      %v1907 = vpack.c.bf16 %v1906, %v1905
      %v1908 = vld [vmem:[%s966] sm:$0xf]
      %v1909 = vld [vmem:[%s966 + $0x4] sm:$0xf]
      %v1910 = vld [vmem:[%s966 + $0x8] sm:$0xf]
      %v1911 = vld [vmem:[%s966 + $0xc] sm:$0xf]
      %v1912 = vld [vmem:[%s969] sm:$0x1]
      %v1914 = vlaneseq
      %v1915 = vshrl.u32 %v1914, 7
      %v1916 = vsub.s32 0, %v1915
      %v1917 = vrot.slane %v1912, %v1916
      %v1923 = vunpack.c.l.b16 %v1908
      %v1924 = vunpack.c.l.b16 %v1909
      %v1925 = vunpack.c.l.b16 %v1910
      %v1926 = vunpack.c.l.b16 %v1911
      %v1927 = vpack.c.b16 %v1924, %v1923
      %v1928 = vpack.c.b16 %v1926, %v1925
      %v1932 = vsel %vm1010, %v1907, 0
      %1934 = vmatprep.subr.bf16.mxu0 0
      %1935 = vmatpush1.bf16.msra.mxu0 0
      %1936 = vmatprep.subr.bf16.mxu0 0
      %1937 = vmatpush1.bf16.msra.mxu0 0
      %1938 = vmatprep.subr.bf16.mxu0 0
      %1939 = vmatpush1.bf16.msra.mxu0 0
      %1940 = vmatprep.subr.bf16.mxu0 0
      %1941 = vmatpush1.bf16.msra.mxu0 0
      %1942 = vmatprep.subr.bf16.mxu0 0
      %1943 = vmatpush1.bf16.msra.mxu0 0
      %1944 = vmatprep.subr.bf16.mxu0 0
      %1945 = vmatpush1.bf16.msra.mxu0 0
      %1946 = vmatprep.subr.bf16.mxu0 0
      %1947 = vmatpush1.bf16.msra.mxu0 %v1928
      %1948 = vmatprep.subr.bf16.mxu0 0
      %1949 = vmatpush1.bf16.msra.mxu0 %v1927
      %1950 = vmatprep.subr.bf16.mxu0 0
      %1951 = vmatpush2.bf16.msra.mxu0 0
      %1952 = vmatprep.subr.bf16.mxu0 0
      %1953 = vmatpush2.bf16.msra.mxu0 0
      %1954 = vmatprep.subr.bf16.mxu0 0
      %1955 = vmatpush2.bf16.msra.mxu0 0
      %1956 = vmatprep.subr.bf16.mxu0 0
      %1957 = vmatpush2.bf16.msra.mxu0 0
      %1958 = vmatprep.subr.bf16.mxu0 0
      %1959 = vmatpush2.bf16.msra.mxu0 0
      %1960 = vmatprep.subr.bf16.mxu0 0
      %1961 = vmatpush2.bf16.msra.mxu0 0
      %1962 = vmatprep.subr.bf16.mxu0 0
      %1963 = vmatpush2.bf16.msra.mxu0 0
      %1964 = vmatprep.subr.bf16.mxu0 0
      %1965 = vmatpush2.bf16.msra.mxu0 0
      %1966 = vmatprep.mubr.bf16.mxu0 0
      %1967 = vmatmul.mubr.bf16.gmra.mxu0 %v1932
      %v1968 = vpop.f32.mrf.mxu0
      %v1969 = vadd.f32 %v1917, %v1968
      %v1970 = vpop.f32.mrf.mxu0
      %v1971 = vpop.f32.mrf.mxu0
      %v1972 = vadd.f32 %v1917, %v1971
      %v1973 = vpop.f32.mrf.mxu0
      %1974 = vdwg.mxu0
      %v1975 = vadd.f32 %v1835, %v1969
      %v1976 = vadd.f32 %v1836, %v1972
      %1978 = vset.pattern.permute.xlu0 0
      %1979 = vperm.xlu0 %1978, %v977
      %v1980 = vpop.permute.xlu0 %1979
      %1983 = vset.pattern.permute.xlu0 0
      %1984 = vperm.xlu0 %1983, %v978
      %v1985 = vpop.permute.xlu0 %1984
      %v1987 = vmul.f32 %v1975, %v1980
      %v1988 = vmul.f32 %v1976, %v1985
      %1989 = vst.msk [vmem:[%s974] sm:$0xff] %vm1010, %v1987
      %1990 = vst.msk [vmem:[%s974 + $0x8] sm:$0xff] %vm1010, %v1988
      %p1991 = scmp.eq.s32.totalorder %s37, 1
      // Predicated region
      $region109: #{bert4rec_forward.1} parent=103 // pred_check
        %p1992 = pneg %p1991
      $region110: #{bert4rec_forward.1} parent=103 // pred_check_branch
        %1994 = sbr.rel (%p1992) target = $region112
      $region111: #{bert4rec_forward.1} parent=103 // pred_region
        %v1995 = vld [vmem:[%s19] sm:$0x1]
        %v1996 = vld [vmem:[%s20] sm:$0x1]
        %v1997 = vsel %vm1010, %v1987, 0.0
        %1998 = vadd.xlane.f32.xlu0 %v1997
        %v1999 = vpop.xlane.xlu0 %1998
        %v2000 = vsel %vm1010, %v1988, 0.0
        %2001 = vadd.xlane.f32.xlu0 %v2000
        %v2002 = vpop.xlane.xlu0 %2001
        %v2003 = vmul.f32 %v1999, %v1017
        %v2004 = vmul.f32 %v2002, %v1017
        %v2005 = vsub.f32 %v1987, %v2003
        %v2006 = vsub.f32 %v1988, %v2004
        %v2007 = vmul.f32 %v2005, %v2005
        %v2008 = vmul.f32 %v2006, %v2006
        %v2009 = vsel %vm1010, %v2007, 0.0
        %2010 = vadd.xlane.f32.xlu0 %v2009
        %v2011 = vpop.xlane.xlu0 %2010
        %v2012 = vsel %vm1010, %v2008, 0.0
        %2013 = vadd.xlane.f32.xlu0 %v2012
        %v2014 = vpop.xlane.xlu0 %2013
        %v2015 = vmul.f32 %v2011, %v1017
        %v2016 = vmul.f32 %v2014, %v1017
        %v2017 = vadd.f32 %v2015, 1e-08
        %v2018 = vadd.f32 %v2016, 1e-08
        %v2019 = vrsqrt.pop %v2017
        %v2020 = vrsqrt.pop %v2018
        %v2021 = vmul.f32 %v2005, %v2019
        %v2022 = vmul.f32 %v2006, %v2020
        %v2024 = vlaneseq
        %v2025 = vshrl.u32 %v2024, 7
        %v2026 = vsub.s32 0, %v2025
        %v2027 = vrot.slane %v1995, %v2026
        %v2029 = vmul.f32 %v2021, %v2027
        %v2030 = vmul.f32 %v2022, %v2027
        %v2032 = vlaneseq
        %v2033 = vshrl.u32 %v2032, 7
        %v2034 = vsub.s32 0, %v2033
        %v2035 = vrot.slane %v1996, %v2034
        %v2037 = vadd.f32 %v2029, %v2035
        %v2038 = vadd.f32 %v2030, %v2035
        %2039 = vst.msk [vmem:[%s974] sm:$0xff] %vm1010, %v2037
        %2040 = vst.msk [vmem:[%s974 + $0x8] sm:$0xff] %vm1010, %v2038
      $region112: #{bert4rec_forward.1} parent=103 // pred_fallthru
        _
      %s2041 = smul.u32 2, %s36
      %p2042 = scmp.lt.s32.totalorder %s2041, 1
      %s2043 = scalar_select %p2042, %s2041, 1
      %s2044 = smul.addr %s2043, 8
      %s2045 = scalar_lea.vmem %s21, %s2044
      // Predicated region
      $region113: #{bert4rec_forward.1} parent=103 // pred_check
        %p2046 = pneg %p598
      $region114: #{bert4rec_forward.1} parent=103 // pred_check_branch
        %2048 = sbr.rel (%p2046) target = $region116
      $region115: #{bert4rec_forward.1} parent=103 // pred_region
        %s2049 = smul.u32 2, %s36
      $region116: #{bert4rec_forward.1} parent=103 // pred_fallthru
        _
      // Predicated region
      $region117: #{bert4rec_forward.1} parent=103 // pred_check
        %p2050 = pneg %p598
      $region118: #{bert4rec_forward.1} parent=103 // pred_check_branch
        %2052 = sbr.rel (%p2050) target = $region120
      $region119: #{bert4rec_forward.1} parent=103 // pred_region
        %s2053 = smul.u32 2, %s36
        %p2054 = scmp.lt.s32.totalorder %s2053, 1
        %s2055 = scalar_select %p2054, %s2053, 1
        %s2056 = smul.addr %s2055, 8
        %s2057 = scalar_lea.vmem %s21, %s2056
      $region120: #{bert4rec_forward.1} parent=103 // pred_fallthru
        _
    $region104: #{bert4rec_forward.1} parent=5 // pred_fallthru
      _
    %p2058 = scmp.le.s32.totalorder 2, %s27
    // Predicated region
    $region121: #{bert4rec_forward.1} parent=5 // pred_check
      %p2059 = pneg %p2058
    $region122: #{bert4rec_forward.1} parent=5 // pred_check_branch
      %2061 = sbr.rel (%p2059) target = $region124
    $region123: #{bert4rec_forward.1} parent=5 // pred_region
      %s2062 = ssub.s32 %s27, 2
    $region124: #{bert4rec_forward.1} parent=5 // pred_fallthru
      _
  $region6: #{bert4rec_forward.1} parent=0 // loop_footer
    %s31 = sadd.s32 1, %s27
  $region7: #{bert4rec_forward.1} parent=0 // loop_footer_branch
    %26 = sbr.rel target = $region3
  $region8: #{bert4rec_forward.1} parent=0 // loop_exit
    _

</llo_original>
